<compile_context>
chip_gen: v7x
topology: tpu7x:2x2x1
jax: 0.10.0
libtpu: 0.0.40
codegen_flags: <defaults>
</compile_context>

<pallas_src>
import functools

import numpy as np

import jax
import jax.numpy as jnp
from jax.experimental import pallas as pl
from jax.experimental.pallas import tpu as pltpu


def _round_up(n, m):
    return ((n + m - 1) // m) * m


# ----------------------------------------------------------------------------
# The fused Pallas kernel: conv1+pool1+conv2+pool2+fc1+fc2 for ONE batch element
# ----------------------------------------------------------------------------
def _actor_kernel(x_ref, m1_ref, b1_ref, m2_ref, b2_ref,
                  p1_ref, s1_ref, p2_ref, s2_ref,
                  w3_ref, b3_ref, w4_ref, b4_ref,
                  out_ref, xpad1_ref, xpad2_ref, *, H):
    bf16 = jnp.bfloat16
    H2, H4 = H // 2, H // 4

    def mm(a, b):                      # bf16 x bf16 -> f32 accumulate on the MXU
        return jnp.dot(a, b, preferred_element_type=jnp.float32)

    # ------------------ conv1: 3x3 'same', C -> C1, + ReLU -------------------
    # Vertical zero padding via a 2-row halo in VMEM scratch; horizontal taps +
    # padding are folded into the banded matrices m1[ki] (W*C, W*C1).
    xpad1_ref[...] = jnp.zeros_like(xpad1_ref)
    xpad1_ref[1:H + 1, :] = x_ref[0].astype(bf16)
    a1 = mm(xpad1_ref[0:H, :], m1_ref[0])
    for ki in range(1, 3):
        a1 += mm(xpad1_ref[ki:ki + H, :], m1_ref[ki])
    a1 = jnp.maximum(a1 + b1_ref[...], 0.0).astype(bf16)            # (H, W*C1)

    # ------------------ maxpool 2x2 via 0/1 selection matmuls ----------------
    v1 = jnp.maximum(mm(p1_ref[0], a1), mm(p1_ref[1], a1)).astype(bf16)   # (H2, W*C1)
    h1 = jnp.maximum(mm(v1, s1_ref[0]), mm(v1, s1_ref[1])).astype(bf16)   # (H2, W2*C1)

    # ------------------ conv2: 3x3 'same', C1 -> C2, + ReLU ------------------
    xpad2_ref[...] = jnp.zeros_like(xpad2_ref)
    xpad2_ref[1:H2 + 1, :] = h1
    a2 = mm(xpad2_ref[0:H2, :], m2_ref[0])
    for ki in range(1, 3):
        a2 += mm(xpad2_ref[ki:ki + H2, :], m2_ref[ki])
    a2 = jnp.maximum(a2 + b2_ref[...], 0.0).astype(bf16)            # (H2, W2*C2)

    # ------------------ maxpool 2x2 -------------------------------------------
    v2 = jnp.maximum(mm(p2_ref[0], a2), mm(p2_ref[1], a2)).astype(bf16)   # (H4, W2*C2)
    h2 = jnp.maximum(mm(v2, s2_ref[0]), mm(v2, s2_ref[1])).astype(bf16)   # (H4, W4*C2)

    # ------------------ fc1 (flatten folded into H4 partial GEMMs) + ReLU -----
    blk = h2.shape[1]                                # = W4*C2 = 128 lanes
    hid = mm(h2[0:1, :], w3_ref[0:blk, :])
    for r in range(1, H4):
        hid += mm(h2[r:r + 1, :], w3_ref[r * blk:(r + 1) * blk, :])
    hid = jnp.maximum(hid + b3_ref[...], 0.0).astype(bf16)          # (1, 128)

    # ------------------ fc2 (linear, lane-padded to 128) ----------------------
    out = mm(hid, w4_ref[...]) + b4_ref[...]                        # (1, 128) f32
    out_ref[...] = out[None].astype(out_ref.dtype)                  # (1, 1, 128)


# ----------------------------------------------------------------------------
# Parameter construction (deterministic; builds banded conv / pooling matrices)
# ----------------------------------------------------------------------------
def init_actor_params(key, in_ch=3, H=16, W=16, num_keypoints=5):
    C1, C2, FC1 = 16, 32, 64
    H2, W2, H4, W4 = H // 2, W // 2, H // 4, W // 4
    FLAT = C2 * H4 * W4
    OUT = 2 * num_keypoints
    FC1P, OUTP = _round_up(FC1, 128), _round_up(OUT, 128)

    def uni(k, shape, fan_in):
        bound = 1.0 / np.sqrt(fan_in)
        return np.asarray(jax.random.uniform(k, shape, jnp.float32, -bound, bound))

    ks = jax.random.split(key, 8)
    k1 = uni(ks[0], (3, 3, in_ch, C1), 9 * in_ch)        # HWIO conv kernel
    b1 = uni(ks[1], (C1,), 9 * in_ch)
    k2 = uni(ks[2], (3, 3, C1, C2), 9 * C1)
    b2 = uni(ks[3], (C2,), 9 * C1)
    w3 = uni(ks[4], (FLAT, FC1), FLAT)                   # rows in (h, w, c) order
    b3 = uni(ks[5], (FC1,), FLAT)
    w4 = uni(ks[6], (FC1, OUT), FC1)
    b4 = uni(ks[7], (OUT,), FC1)

    # Banded matrix per vertical tap ki:
    #   M[ki, w_in*Cin + c, w_out*Cout + co] = k[ki, w_in - w_out + 1, c, co]
    # (terms falling outside the width implement the horizontal zero padding).
    def banded(k_hwio, Wd):
        KH, KW, Cin, Cout = k_hwio.shape
        M = np.zeros((KH, Wd * Cin, Wd * Cout), np.float32)
        for ki in range(KH):
            for kj in range(KW):
                for wo in range(Wd):
                    wi = wo + kj - 1
                    if 0 <= wi < Wd:
                        M[ki, wi * Cin:(wi + 1) * Cin,
                          wo * Cout:(wo + 1) * Cout] = k_hwio[ki, kj]
        return M

    def pool_row_sel(Hd):                      # (2, Hd/2, Hd): rows 2i / 2i+1
        P = np.zeros((2, Hd // 2, Hd), np.float32)
        for i in range(Hd // 2):
            P[0, i, 2 * i] = 1.0
            P[1, i, 2 * i + 1] = 1.0
        return P

    def pool_col_sel(Wd, Cd):                  # (2, Wd*Cd, (Wd/2)*Cd): groups 2j / 2j+1
        S = np.zeros((2, Wd * Cd, (Wd // 2) * Cd), np.float32)
        for j in range(Wd // 2):
            for c in range(Cd):
                S[0, (2 * j) * Cd + c, j * Cd + c] = 1.0
                S[1, (2 * j + 1) * Cd + c, j * Cd + c] = 1.0
        return S

    # Zero-pad fc weights to 128 lanes (zero cols/rows are exact through ReLU).
    w3p = np.zeros((FLAT, FC1P), np.float32); w3p[:, :FC1] = w3
    b3p = np.zeros((FC1P,), np.float32);      b3p[:FC1] = b3
    w4p = np.zeros((FC1P, OUTP), np.float32); w4p[:FC1, :OUT] = w4
    b4p = np.zeros((OUTP,), np.float32);      b4p[:OUT] = b4

    bf = jnp.bfloat16
    return {
        "m1": jnp.asarray(banded(k1, W), bf),                        # (3, W*C, W*C1)
        "b1row": jnp.asarray(np.tile(b1, W), jnp.float32).reshape(1, W * C1),
        "m2": jnp.asarray(banded(k2, W2), bf),                       # (3, W2*C1, W2*C2)
        "b2row": jnp.asarray(np.tile(b2, W2), jnp.float32).reshape(1, W2 * C2),
        "p1": jnp.asarray(pool_row_sel(H), bf),                      # (2, H2, H)
        "s1": jnp.asarray(pool_col_sel(W, C1), bf),                  # (2, W*C1, W2*C1)
        "p2": jnp.asarray(pool_row_sel(H2), bf),                     # (2, H4, H2)
        "s2": jnp.asarray(pool_col_sel(W2, C2), bf),                 # (2, W2*C2, W4*C2)
        "w3": jnp.asarray(w3p, bf),                                  # (512, 128)
        "b3row": jnp.asarray(b3p, jnp.float32).reshape(1, FC1P),
        "w4": jnp.asarray(w4p, bf),                                  # (128, 128)
        "b4row": jnp.asarray(b4p, jnp.float32).reshape(1, OUTP),
    }


# ----------------------------------------------------------------------------
# Forward pass (Actor.forward == KeyPointEstimator.forward), one fused kernel
# ----------------------------------------------------------------------------
def _full_spec(arr):
    nd = arr.ndim
    return pl.BlockSpec(arr.shape, lambda *_: (0,) * nd)


@functools.partial(jax.jit, static_argnames=("num_keypoints",))
def actor_forward(params, x_nchw, num_keypoints=5):
    # NCHW (PyTorch) -> NHWC -> rows = h, cols = (w, c)   [layout glue only]
    x = jnp.transpose(x_nchw, (0, 2, 3, 1)).astype(jnp.float32)
    B, H, W, C = x.shape
    H2, W2 = H // 2, W // 2
    C1 = params["b1row"].shape[1] // W
    OUTP = params["b4row"].shape[1]
    x2d = x.reshape(B, H, W * C)

    kern = functools.partial(_actor_kernel, H=H)

    out = pl.pallas_call(
        kern,
        out_shape=jax.ShapeDtypeStruct((B, 1, OUTP), jnp.float32),
        grid_spec=pltpu.PrefetchScalarGridSpec(
            num_scalar_prefetch=0,
            grid=(B,),
            in_specs=[
                pl.BlockSpec((1, H, W * C), lambda b: (b, 0, 0)),   # x (per batch)
                _full_spec(params["m1"]),
                _full_spec(params["b1row"]),
                _full_spec(params["m2"]),
                _full_spec(params["b2row"]),
                _full_spec(params["p1"]),
                _full_spec(params["s1"]),
                _full_spec(params["p2"]),
                _full_spec(params["s2"]),
                _full_spec(params["w3"]),
                _full_spec(params["b3row"]),
                _full_spec(params["w4"]),
                _full_spec(params["b4row"]),
            ],
            out_specs=pl.BlockSpec((1, 1, OUTP), lambda b: (b, 0, 0)),
            scratch_shapes=[
                pltpu.VMEM((H + 2, W * C), jnp.bfloat16),      # conv1 vertical halo
                pltpu.VMEM((H2 + 2, W2 * C1), jnp.bfloat16),   # conv2 vertical halo
            ],
        ),
        compiler_params=pltpu.CompilerParams(
            dimension_semantics=("parallel",)),   # v7x: one batch per TensorCore
    )(x2d, params["m1"], params["b1row"], params["m2"], params["b2row"],
      params["p1"], params["s1"], params["p2"], params["s2"],
      params["w3"], params["b3row"], params["w4"], params["b4row"])

    # Slice the lane padding back off: (B, 128) -> (B, 2*num_keypoints)
    return out.reshape(B, OUTP)[:, : 2 * num_keypoints]


if __name__ == "__main__":
    key = jax.random.PRNGKey(0)
    k_param, k_x = jax.random.split(key)

    B, C, H, W = 2, 3, 16, 16
    x = jax.random.normal(k_x, (B, C, H, W), jnp.float32)       # NCHW input
    params = init_actor_params(k_param, in_ch=C, H=H, W=W, num_keypoints=5)

    y = actor_forward(params, x)
    jax.block_until_ready(y)

    assert y.shape == (B, 10), y.shape
    assert y.dtype == jnp.float32
    assert bool(jnp.all(jnp.isfinite(y)))
    print("KERNEL_OK")
</pallas_src>

<mosaic_0001>
module attributes {stable_mosaic.version = 11 : i64} {
  func.func @_actor_kernel(%arg0: i32, %arg1: memref<1x16x48xf32, #tpu.memory_space<vmem>>, %arg2: memref<3x48x256xbf16, #tpu.memory_space<vmem>>, %arg3: memref<1x256xf32, #tpu.memory_space<vmem>>, %arg4: memref<3x128x256xbf16, #tpu.memory_space<vmem>>, %arg5: memref<1x256xf32, #tpu.memory_space<vmem>>, %arg6: memref<2x8x16xbf16, #tpu.memory_space<vmem>>, %arg7: memref<2x256x128xbf16, #tpu.memory_space<vmem>>, %arg8: memref<2x4x8xbf16, #tpu.memory_space<vmem>>, %arg9: memref<2x256x128xbf16, #tpu.memory_space<vmem>>, %arg10: memref<512x128xbf16, #tpu.memory_space<vmem>>, %arg11: memref<1x128xf32, #tpu.memory_space<vmem>>, %arg12: memref<128x128xbf16, #tpu.memory_space<vmem>>, %arg13: memref<1x128xf32, #tpu.memory_space<vmem>>, %arg14: memref<1x1x128xf32, #tpu.memory_space<vmem>>, %arg15: memref<18x48xbf16, #tpu.memory_space<vmem>>, %arg16: memref<10x128xbf16, #tpu.memory_space<vmem>>) attributes {dimension_semantics = [#tpu.dimension_semantics<parallel>], iteration_bounds = array<i64: 2>, scalar_prefetch = 0 : i64, scratch_operands = 2 : i64, tpu.core_type = #tpu.core_type<tc>, window_params = [{transform_indices = @transform_0, window_bounds = array<i64: 1, 16, 48>}, {pipeline_mode = #tpu.pipeline_mode<synchronous>, transform_indices = @transform_1, window_bounds = array<i64: 3, 48, 256>}, {pipeline_mode = #tpu.pipeline_mode<synchronous>, transform_indices = @transform_2, window_bounds = array<i64: 1, 256>}, {pipeline_mode = #tpu.pipeline_mode<synchronous>, transform_indices = @transform_3, window_bounds = array<i64: 3, 128, 256>}, {pipeline_mode = #tpu.pipeline_mode<synchronous>, transform_indices = @transform_4, window_bounds = array<i64: 1, 256>}, {pipeline_mode = #tpu.pipeline_mode<synchronous>, transform_indices = @transform_5, window_bounds = array<i64: 2, 8, 16>}, {pipeline_mode = #tpu.pipeline_mode<synchronous>, transform_indices = @transform_6, window_bounds = array<i64: 2, 256, 128>}, {pipeline_mode = #tpu.pipeline_mode<synchronous>, transform_indices = @transform_7, window_bounds = array<i64: 2, 4, 8>}, {pipeline_mode = #tpu.pipeline_mode<synchronous>, transform_indices = @transform_8, window_bounds = array<i64: 2, 256, 128>}, {pipeline_mode = #tpu.pipeline_mode<synchronous>, transform_indices = @transform_9, window_bounds = array<i64: 512, 128>}, {pipeline_mode = #tpu.pipeline_mode<synchronous>, transform_indices = @transform_10, window_bounds = array<i64: 1, 128>}, {pipeline_mode = #tpu.pipeline_mode<synchronous>, transform_indices = @transform_11, window_bounds = array<i64: 128, 128>}, {pipeline_mode = #tpu.pipeline_mode<synchronous>, transform_indices = @transform_12, window_bounds = array<i64: 1, 128>}, {transform_indices = @transform_13, window_bounds = array<i64: 1, 1, 128>}]} {
    %cst = arith.constant 0.000000e+00 : bf16
    %0 = vector.broadcast %cst : bf16 to vector<18x48xbf16>
    %c0 = arith.constant 0 : index
    %c0_0 = arith.constant 0 : index
    %1 = vector.load %arg15[%c0, %c0_0] : memref<18x48xbf16, #tpu.memory_space<vmem>>, vector<18x48xbf16>
    tpu.vector_store %arg15[%c0, %c0_0], %0 {strides = array<i32>} : memref<18x48xbf16, #tpu.memory_space<vmem>>, vector<18x48xbf16>,
    %c0_1 = arith.constant 0 : index
    %c0_2 = arith.constant 0 : index
    %c0_3 = arith.constant 0 : index
    %2 = vector.load %arg1[%c0_1, %c0_2, %c0_3] : memref<1x16x48xf32, #tpu.memory_space<vmem>>, vector<1x16x48xf32>
    %3 = vector.shape_cast %2 : vector<1x16x48xf32> to vector<16x48xf32>
    %4 = arith.truncf %3 : vector<16x48xf32> to vector<16x48xbf16>
    %c1 = arith.constant 1 : index
    %c0_4 = arith.constant 0 : index
    %5 = vector.load %arg15[%c1, %c0_4] : memref<18x48xbf16, #tpu.memory_space<vmem>>, vector<16x48xbf16>
    tpu.vector_store %arg15[%c1, %c0_4], %4 {strides = array<i32>} : memref<18x48xbf16, #tpu.memory_space<vmem>>, vector<16x48xbf16>,
    %c0_5 = arith.constant 0 : index
    %c0_6 = arith.constant 0 : index
    %6 = vector.load %arg15[%c0_5, %c0_6] : memref<18x48xbf16, #tpu.memory_space<vmem>>, vector<16x48xbf16>
    %c0_7 = arith.constant 0 : index
    %c0_8 = arith.constant 0 : index
    %c0_9 = arith.constant 0 : index
    %7 = vector.load %arg2[%c0_7, %c0_8, %c0_9] : memref<3x48x256xbf16, #tpu.memory_space<vmem>>, vector<1x48x256xbf16>
    %8 = vector.shape_cast %7 : vector<1x48x256xbf16> to vector<48x256xbf16>
    %cst_10 = arith.constant dense<0.000000e+00> : vector<16x256xf32>
    %9 = tpu.matmul %6, %8, %cst_10 {dimension_numbers = #tpu.dot_dimension_numbers<[1], [0], [0], [1], [0, 0, 1, 1], [], []>} : vector<16x48xbf16>, vector<48x256xbf16>, vector<16x256xf32> -> vector<16x256xf32>
    %c1_11 = arith.constant 1 : index
    %c0_12 = arith.constant 0 : index
    %10 = vector.load %arg15[%c1_11, %c0_12] : memref<18x48xbf16, #tpu.memory_space<vmem>>, vector<16x48xbf16>
    %c1_13 = arith.constant 1 : index
    %c0_14 = arith.constant 0 : index
    %c0_15 = arith.constant 0 : index
    %11 = vector.load %arg2[%c1_13, %c0_14, %c0_15] : memref<3x48x256xbf16, #tpu.memory_space<vmem>>, vector<1x48x256xbf16>
    %12 = vector.shape_cast %11 : vector<1x48x256xbf16> to vector<48x256xbf16>
    %cst_16 = arith.constant dense<0.000000e+00> : vector<16x256xf32>
    %13 = tpu.matmul %10, %12, %cst_16 {dimension_numbers = #tpu.dot_dimension_numbers<[1], [0], [0], [1], [0, 0, 1, 1], [], []>} : vector<16x48xbf16>, vector<48x256xbf16>, vector<16x256xf32> -> vector<16x256xf32>
    %14 = arith.addf %9, %13 : vector<16x256xf32>
    %c2 = arith.constant 2 : index
    %c0_17 = arith.constant 0 : index
    %15 = vector.load %arg15[%c2, %c0_17] : memref<18x48xbf16, #tpu.memory_space<vmem>>, vector<16x48xbf16>
    %c2_18 = arith.constant 2 : index
    %c0_19 = arith.constant 0 : index
    %c0_20 = arith.constant 0 : index
    %16 = vector.load %arg2[%c2_18, %c0_19, %c0_20] : memref<3x48x256xbf16, #tpu.memory_space<vmem>>, vector<1x48x256xbf16>
    %17 = vector.shape_cast %16 : vector<1x48x256xbf16> to vector<48x256xbf16>
    %cst_21 = arith.constant dense<0.000000e+00> : vector<16x256xf32>
    %18 = tpu.matmul %15, %17, %cst_21 {dimension_numbers = #tpu.dot_dimension_numbers<[1], [0], [0], [1], [0, 0, 1, 1], [], []>} : vector<16x48xbf16>, vector<48x256xbf16>, vector<16x256xf32> -> vector<16x256xf32>
    %19 = arith.addf %14, %18 : vector<16x256xf32>
    %c0_22 = arith.constant 0 : index
    %c0_23 = arith.constant 0 : index
    %20 = vector.load %arg3[%c0_22, %c0_23] : memref<1x256xf32, #tpu.memory_space<vmem>>, vector<1x256xf32>
    %21 = vector.broadcast %20 : vector<1x256xf32> to vector<16x256xf32>
    %22 = arith.addf %19, %21 : vector<16x256xf32>
    %cst_24 = arith.constant 0.000000e+00 : f32
    %23 = vector.broadcast %cst_24 : f32 to vector<16x256xf32>
    %24 = arith.maximumf %22, %23 : vector<16x256xf32>
    %25 = arith.truncf %24 : vector<16x256xf32> to vector<16x256xbf16>
    %c0_25 = arith.constant 0 : index
    %c0_26 = arith.constant 0 : index
    %c0_27 = arith.constant 0 : index
    %26 = vector.load %arg6[%c0_25, %c0_26, %c0_27] : memref<2x8x16xbf16, #tpu.memory_space<vmem>>, vector<1x8x16xbf16>
    %27 = vector.shape_cast %26 : vector<1x8x16xbf16> to vector<8x16xbf16>
    %cst_28 = arith.constant dense<0.000000e+00> : vector<8x256xf32>
    %28 = tpu.matmul %27, %25, %cst_28 {dimension_numbers = #tpu.dot_dimension_numbers<[1], [0], [0], [1], [0, 0, 1, 1], [], []>} : vector<8x16xbf16>, vector<16x256xbf16>, vector<8x256xf32> -> vector<8x256xf32>
    %c1_29 = arith.constant 1 : index
    %c0_30 = arith.constant 0 : index
    %c0_31 = arith.constant 0 : index
    %29 = vector.load %arg6[%c1_29, %c0_30, %c0_31] : memref<2x8x16xbf16, #tpu.memory_space<vmem>>, vector<1x8x16xbf16>
    %30 = vector.shape_cast %29 : vector<1x8x16xbf16> to vector<8x16xbf16>
    %cst_32 = arith.constant dense<0.000000e+00> : vector<8x256xf32>
    %31 = tpu.matmul %30, %25, %cst_32 {dimension_numbers = #tpu.dot_dimension_numbers<[1], [0], [0], [1], [0, 0, 1, 1], [], []>} : vector<8x16xbf16>, vector<16x256xbf16>, vector<8x256xf32> -> vector<8x256xf32>
    %32 = arith.maximumf %28, %31 : vector<8x256xf32>
    %33 = arith.truncf %32 : vector<8x256xf32> to vector<8x256xbf16>
    %c0_33 = arith.constant 0 : index
    %c0_34 = arith.constant 0 : index
    %c0_35 = arith.constant 0 : index
    %34 = vector.load %arg7[%c0_33, %c0_34, %c0_35] : memref<2x256x128xbf16, #tpu.memory_space<vmem>>, vector<1x256x128xbf16>
    %35 = vector.shape_cast %34 : vector<1x256x128xbf16> to vector<256x128xbf16>
    %cst_36 = arith.constant dense<0.000000e+00> : vector<8x128xf32>
    %36 = tpu.matmul %33, %35, %cst_36 {dimension_numbers = #tpu.dot_dimension_numbers<[1], [0], [0], [1], [0, 0, 1, 1], [], []>} : vector<8x256xbf16>, vector<256x128xbf16>, vector<8x128xf32> -> vector<8x128xf32>
    %c1_37 = arith.constant 1 : index
    %c0_38 = arith.constant 0 : index
    %c0_39 = arith.constant 0 : index
    %37 = vector.load %arg7[%c1_37, %c0_38, %c0_39] : memref<2x256x128xbf16, #tpu.memory_space<vmem>>, vector<1x256x128xbf16>
    %38 = vector.shape_cast %37 : vector<1x256x128xbf16> to vector<256x128xbf16>
    %cst_40 = arith.constant dense<0.000000e+00> : vector<8x128xf32>
    %39 = tpu.matmul %33, %38, %cst_40 {dimension_numbers = #tpu.dot_dimension_numbers<[1], [0], [0], [1], [0, 0, 1, 1], [], []>} : vector<8x256xbf16>, vector<256x128xbf16>, vector<8x128xf32> -> vector<8x128xf32>
    %40 = arith.maximumf %36, %39 : vector<8x128xf32>
    %41 = arith.truncf %40 : vector<8x128xf32> to vector<8x128xbf16>
    %cst_41 = arith.constant 0.000000e+00 : bf16
    %42 = vector.broadcast %cst_41 : bf16 to vector<10x128xbf16>
    %c0_42 = arith.constant 0 : index
    %c0_43 = arith.constant 0 : index
    %43 = vector.load %arg16[%c0_42, %c0_43] : memref<10x128xbf16, #tpu.memory_space<vmem>>, vector<10x128xbf16>
    tpu.vector_store %arg16[%c0_42, %c0_43], %42 {strides = array<i32>} : memref<10x128xbf16, #tpu.memory_space<vmem>>, vector<10x128xbf16>,
    %c1_44 = arith.constant 1 : index
    %c0_45 = arith.constant 0 : index
    %44 = vector.load %arg16[%c1_44, %c0_45] : memref<10x128xbf16, #tpu.memory_space<vmem>>, vector<8x128xbf16>
    tpu.vector_store %arg16[%c1_44, %c0_45], %41 {strides = array<i32>} : memref<10x128xbf16, #tpu.memory_space<vmem>>, vector<8x128xbf16>,
    %c0_46 = arith.constant 0 : index
    %c0_47 = arith.constant 0 : index
    %45 = vector.load %arg16[%c0_46, %c0_47] : memref<10x128xbf16, #tpu.memory_space<vmem>>, vector<8x128xbf16>
    %c0_48 = arith.constant 0 : index
    %c0_49 = arith.constant 0 : index
    %c0_50 = arith.constant 0 : index
    %46 = vector.load %arg4[%c0_48, %c0_49, %c0_50] : memref<3x128x256xbf16, #tpu.memory_space<vmem>>, vector<1x128x256xbf16>
    %47 = vector.shape_cast %46 : vector<1x128x256xbf16> to vector<128x256xbf16>
    %cst_51 = arith.constant dense<0.000000e+00> : vector<8x256xf32>
    %48 = tpu.matmul %45, %47, %cst_51 {dimension_numbers = #tpu.dot_dimension_numbers<[1], [0], [0], [1], [0, 0, 1, 1], [], []>} : vector<8x128xbf16>, vector<128x256xbf16>, vector<8x256xf32> -> vector<8x256xf32>
    %c1_52 = arith.constant 1 : index
    %c0_53 = arith.constant 0 : index
    %49 = vector.load %arg16[%c1_52, %c0_53] : memref<10x128xbf16, #tpu.memory_space<vmem>>, vector<8x128xbf16>
    %c1_54 = arith.constant 1 : index
    %c0_55 = arith.constant 0 : index
    %c0_56 = arith.constant 0 : index
    %50 = vector.load %arg4[%c1_54, %c0_55, %c0_56] : memref<3x128x256xbf16, #tpu.memory_space<vmem>>, vector<1x128x256xbf16>
    %51 = vector.shape_cast %50 : vector<1x128x256xbf16> to vector<128x256xbf16>
    %cst_57 = arith.constant dense<0.000000e+00> : vector<8x256xf32>
    %52 = tpu.matmul %49, %51, %cst_57 {dimension_numbers = #tpu.dot_dimension_numbers<[1], [0], [0], [1], [0, 0, 1, 1], [], []>} : vector<8x128xbf16>, vector<128x256xbf16>, vector<8x256xf32> -> vector<8x256xf32>
    %53 = arith.addf %48, %52 : vector<8x256xf32>
    %c2_58 = arith.constant 2 : index
    %c0_59 = arith.constant 0 : index
    %54 = vector.load %arg16[%c2_58, %c0_59] : memref<10x128xbf16, #tpu.memory_space<vmem>>, vector<8x128xbf16>
    %c2_60 = arith.constant 2 : index
    %c0_61 = arith.constant 0 : index
    %c0_62 = arith.constant 0 : index
    %55 = vector.load %arg4[%c2_60, %c0_61, %c0_62] : memref<3x128x256xbf16, #tpu.memory_space<vmem>>, vector<1x128x256xbf16>
    %56 = vector.shape_cast %55 : vector<1x128x256xbf16> to vector<128x256xbf16>
    %cst_63 = arith.constant dense<0.000000e+00> : vector<8x256xf32>
    %57 = tpu.matmul %54, %56, %cst_63 {dimension_numbers = #tpu.dot_dimension_numbers<[1], [0], [0], [1], [0, 0, 1, 1], [], []>} : vector<8x128xbf16>, vector<128x256xbf16>, vector<8x256xf32> -> vector<8x256xf32>
    %58 = arith.addf %53, %57 : vector<8x256xf32>
    %c0_64 = arith.constant 0 : index
    %c0_65 = arith.constant 0 : index
    %59 = vector.load %arg5[%c0_64, %c0_65] : memref<1x256xf32, #tpu.memory_space<vmem>>, vector<1x256xf32>
    %60 = vector.broadcast %59 : vector<1x256xf32> to vector<8x256xf32>
    %61 = arith.addf %58, %60 : vector<8x256xf32>
    %cst_66 = arith.constant 0.000000e+00 : f32
    %62 = vector.broadcast %cst_66 : f32 to vector<8x256xf32>
    %63 = arith.maximumf %61, %62 : vector<8x256xf32>
    %64 = arith.truncf %63 : vector<8x256xf32> to vector<8x256xbf16>
    %c0_67 = arith.constant 0 : index
    %c0_68 = arith.constant 0 : index
    %c0_69 = arith.constant 0 : index
    %65 = vector.load %arg8[%c0_67, %c0_68, %c0_69] : memref<2x4x8xbf16, #tpu.memory_space<vmem>>, vector<1x4x8xbf16>
    %66 = vector.shape_cast %65 : vector<1x4x8xbf16> to vector<4x8xbf16>
    %cst_70 = arith.constant dense<0.000000e+00> : vector<4x256xf32>
    %67 = tpu.matmul %66, %64, %cst_70 {dimension_numbers = #tpu.dot_dimension_numbers<[1], [0], [0], [1], [0, 0, 1, 1], [], []>} : vector<4x8xbf16>, vector<8x256xbf16>, vector<4x256xf32> -> vector<4x256xf32>
    %c1_71 = arith.constant 1 : index
    %c0_72 = arith.constant 0 : index
    %c0_73 = arith.constant 0 : index
    %68 = vector.load %arg8[%c1_71, %c0_72, %c0_73] : memref<2x4x8xbf16, #tpu.memory_space<vmem>>, vector<1x4x8xbf16>
    %69 = vector.shape_cast %68 : vector<1x4x8xbf16> to vector<4x8xbf16>
    %cst_74 = arith.constant dense<0.000000e+00> : vector<4x256xf32>
    %70 = tpu.matmul %69, %64, %cst_74 {dimension_numbers = #tpu.dot_dimension_numbers<[1], [0], [0], [1], [0, 0, 1, 1], [], []>} : vector<4x8xbf16>, vector<8x256xbf16>, vector<4x256xf32> -> vector<4x256xf32>
    %71 = arith.maximumf %67, %70 : vector<4x256xf32>
    %72 = arith.truncf %71 : vector<4x256xf32> to vector<4x256xbf16>
    %c0_75 = arith.constant 0 : index
    %c0_76 = arith.constant 0 : index
    %c0_77 = arith.constant 0 : index
    %73 = vector.load %arg9[%c0_75, %c0_76, %c0_77] : memref<2x256x128xbf16, #tpu.memory_space<vmem>>, vector<1x256x128xbf16>
    %74 = vector.shape_cast %73 : vector<1x256x128xbf16> to vector<256x128xbf16>
    %cst_78 = arith.constant dense<0.000000e+00> : vector<4x128xf32>
    %75 = tpu.matmul %72, %74, %cst_78 {dimension_numbers = #tpu.dot_dimension_numbers<[1], [0], [0], [1], [0, 0, 1, 1], [], []>} : vector<4x256xbf16>, vector<256x128xbf16>, vector<4x128xf32> -> vector<4x128xf32>
    %c1_79 = arith.constant 1 : index
    %c0_80 = arith.constant 0 : index
    %c0_81 = arith.constant 0 : index
    %76 = vector.load %arg9[%c1_79, %c0_80, %c0_81] : memref<2x256x128xbf16, #tpu.memory_space<vmem>>, vector<1x256x128xbf16>
    %77 = vector.shape_cast %76 : vector<1x256x128xbf16> to vector<256x128xbf16>
    %cst_82 = arith.constant dense<0.000000e+00> : vector<4x128xf32>
    %78 = tpu.matmul %72, %77, %cst_82 {dimension_numbers = #tpu.dot_dimension_numbers<[1], [0], [0], [1], [0, 0, 1, 1], [], []>} : vector<4x256xbf16>, vector<256x128xbf16>, vector<4x128xf32> -> vector<4x128xf32>
    %79 = arith.maximumf %75, %78 : vector<4x128xf32>
    %80 = arith.truncf %79 : vector<4x128xf32> to vector<4x128xbf16>
    %81 = vector.extract_strided_slice %80 {offsets = [0, 0], sizes = [1, 128], strides = [1, 1]} : vector<4x128xbf16> to vector<1x128xbf16>
    %c0_83 = arith.constant 0 : index
    %c0_84 = arith.constant 0 : index
    %82 = vector.load %arg10[%c0_83, %c0_84] : memref<512x128xbf16, #tpu.memory_space<vmem>>, vector<128x128xbf16>
    %cst_85 = arith.constant dense<0.000000e+00> : vector<1x128xf32>
    %83 = tpu.matmul %81, %82, %cst_85 {dimension_numbers = #tpu.dot_dimension_numbers<[1], [0], [0], [1], [0, 0, 1, 1], [], []>} : vector<1x128xbf16>, vector<128x128xbf16>, vector<1x128xf32> -> vector<1x128xf32>
    %84 = vector.extract_strided_slice %80 {offsets = [1, 0], sizes = [1, 128], strides = [1, 1]} : vector<4x128xbf16> to vector<1x128xbf16>
    %c128 = arith.constant 128 : index
    %c0_86 = arith.constant 0 : index
    %85 = vector.load %arg10[%c128, %c0_86] : memref<512x128xbf16, #tpu.memory_space<vmem>>, vector<128x128xbf16>
    %cst_87 = arith.constant dense<0.000000e+00> : vector<1x128xf32>
    %86 = tpu.matmul %84, %85, %cst_87 {dimension_numbers = #tpu.dot_dimension_numbers<[1], [0], [0], [1], [0, 0, 1, 1], [], []>} : vector<1x128xbf16>, vector<128x128xbf16>, vector<1x128xf32> -> vector<1x128xf32>
    %87 = arith.addf %83, %86 : vector<1x128xf32>
    %88 = vector.extract_strided_slice %80 {offsets = [2, 0], sizes = [1, 128], strides = [1, 1]} : vector<4x128xbf16> to vector<1x128xbf16>
    %c256 = arith.constant 256 : index
    %c0_88 = arith.constant 0 : index
    %89 = vector.load %arg10[%c256, %c0_88] : memref<512x128xbf16, #tpu.memory_space<vmem>>, vector<128x128xbf16>
    %cst_89 = arith.constant dense<0.000000e+00> : vector<1x128xf32>
    %90 = tpu.matmul %88, %89, %cst_89 {dimension_numbers = #tpu.dot_dimension_numbers<[1], [0], [0], [1], [0, 0, 1, 1], [], []>} : vector<1x128xbf16>, vector<128x128xbf16>, vector<1x128xf32> -> vector<1x128xf32>
    %91 = arith.addf %87, %90 : vector<1x128xf32>
    %92 = vector.extract_strided_slice %80 {offsets = [3, 0], sizes = [1, 128], strides = [1, 1]} : vector<4x128xbf16> to vector<1x128xbf16>
    %c384 = arith.constant 384 : index
    %c0_90 = arith.constant 0 : index
    %93 = vector.load %arg10[%c384, %c0_90] : memref<512x128xbf16, #tpu.memory_space<vmem>>, vector<128x128xbf16>
    %cst_91 = arith.constant dense<0.000000e+00> : vector<1x128xf32>
    %94 = tpu.matmul %92, %93, %cst_91 {dimension_numbers = #tpu.dot_dimension_numbers<[1], [0], [0], [1], [0, 0, 1, 1], [], []>} : vector<1x128xbf16>, vector<128x128xbf16>, vector<1x128xf32> -> vector<1x128xf32>
    %95 = arith.addf %91, %94 : vector<1x128xf32>
    %c0_92 = arith.constant 0 : index
    %c0_93 = arith.constant 0 : index
    %96 = vector.load %arg11[%c0_92, %c0_93] : memref<1x128xf32, #tpu.memory_space<vmem>>, vector<1x128xf32>
    %97 = arith.addf %95, %96 : vector<1x128xf32>
    %cst_94 = arith.constant 0.000000e+00 : f32
    %98 = vector.broadcast %cst_94 : f32 to vector<1x128xf32>
    %99 = arith.maximumf %97, %98 : vector<1x128xf32>
    %100 = arith.truncf %99 : vector<1x128xf32> to vector<1x128xbf16>
    %c0_95 = arith.constant 0 : index
    %c0_96 = arith.constant 0 : index
    %101 = vector.load %arg12[%c0_95, %c0_96] : memref<128x128xbf16, #tpu.memory_space<vmem>>, vector<128x128xbf16>
    %cst_97 = arith.constant dense<0.000000e+00> : vector<1x128xf32>
    %102 = tpu.matmul %100, %101, %cst_97 {dimension_numbers = #tpu.dot_dimension_numbers<[1], [0], [0], [1], [0, 0, 1, 1], [], []>} : vector<1x128xbf16>, vector<128x128xbf16>, vector<1x128xf32> -> vector<1x128xf32>
    %c0_98 = arith.constant 0 : index
    %c0_99 = arith.constant 0 : index
    %103 = vector.load %arg13[%c0_98, %c0_99] : memref<1x128xf32, #tpu.memory_space<vmem>>, vector<1x128xf32>
    %104 = arith.addf %102, %103 : vector<1x128xf32>
    %105 = vector.shape_cast %104 : vector<1x128xf32> to vector<1x1x128xf32>
    %c0_100 = arith.constant 0 : index
    %c0_101 = arith.constant 0 : index
    %c0_102 = arith.constant 0 : index
    %106 = vector.load %arg14[%c0_100, %c0_101, %c0_102] : memref<1x1x128xf32, #tpu.memory_space<vmem>>, vector<1x1x128xf32>
    tpu.vector_store %arg14[%c0_100, %c0_101, %c0_102], %105 {strides = array<i32>} : memref<1x1x128xf32, #tpu.memory_space<vmem>>, vector<1x1x128xf32>,
    return
  }
  func.func @transform_0(%arg0: i32) -> (i32, i32, i32) {
    %c0_i32 = arith.constant 0 : i32
    %c0_i32_0 = arith.constant 0 : i32
    %c0_i32_1 = arith.constant 0 : i32
    return %arg0, %c0_i32, %c0_i32_0 : i32, i32, i32
  }
  func.func @transform_1(%arg0: i32) -> (i32, i32, i32) {
    %c0_i32 = arith.constant 0 : i32
    %c0_i32_0 = arith.constant 0 : i32
    %c0_i32_1 = arith.constant 0 : i32
    %c0_i32_2 = arith.constant 0 : i32
    return %c0_i32, %c0_i32_0, %c0_i32_1 : i32, i32, i32
  }
  func.func @transform_2(%arg0: i32) -> (i32, i32) {
    %c0_i32 = arith.constant 0 : i32
    %c0_i32_0 = arith.constant 0 : i32
    %c0_i32_1 = arith.constant 0 : i32
    return %c0_i32, %c0_i32_0 : i32, i32
  }
  func.func @transform_3(%arg0: i32) -> (i32, i32, i32) {
    %c0_i32 = arith.constant 0 : i32
    %c0_i32_0 = arith.constant 0 : i32
    %c0_i32_1 = arith.constant 0 : i32
    %c0_i32_2 = arith.constant 0 : i32
    return %c0_i32, %c0_i32_0, %c0_i32_1 : i32, i32, i32
  }
  func.func @transform_4(%arg0: i32) -> (i32, i32) {
    %c0_i32 = arith.constant 0 : i32
    %c0_i32_0 = arith.constant 0 : i32
    %c0_i32_1 = arith.constant 0 : i32
    return %c0_i32, %c0_i32_0 : i32, i32
  }
  func.func @transform_5(%arg0: i32) -> (i32, i32, i32) {
    %c0_i32 = arith.constant 0 : i32
    %c0_i32_0 = arith.constant 0 : i32
    %c0_i32_1 = arith.constant 0 : i32
    %c0_i32_2 = arith.constant 0 : i32
    return %c0_i32, %c0_i32_0, %c0_i32_1 : i32, i32, i32
  }
  func.func @transform_6(%arg0: i32) -> (i32, i32, i32) {
    %c0_i32 = arith.constant 0 : i32
    %c0_i32_0 = arith.constant 0 : i32
    %c0_i32_1 = arith.constant 0 : i32
    %c0_i32_2 = arith.constant 0 : i32
    return %c0_i32, %c0_i32_0, %c0_i32_1 : i32, i32, i32
  }
  func.func @transform_7(%arg0: i32) -> (i32, i32, i32) {
    %c0_i32 = arith.constant 0 : i32
    %c0_i32_0 = arith.constant 0 : i32
    %c0_i32_1 = arith.constant 0 : i32
    %c0_i32_2 = arith.constant 0 : i32
    return %c0_i32, %c0_i32_0, %c0_i32_1 : i32, i32, i32
  }
  func.func @transform_8(%arg0: i32) -> (i32, i32, i32) {
    %c0_i32 = arith.constant 0 : i32
    %c0_i32_0 = arith.constant 0 : i32
    %c0_i32_1 = arith.constant 0 : i32
    %c0_i32_2 = arith.constant 0 : i32
    return %c0_i32, %c0_i32_0, %c0_i32_1 : i32, i32, i32
  }
  func.func @transform_9(%arg0: i32) -> (i32, i32) {
    %c0_i32 = arith.constant 0 : i32
    %c0_i32_0 = arith.constant 0 : i32
    %c0_i32_1 = arith.constant 0 : i32
    return %c0_i32, %c0_i32_0 : i32, i32
  }
  func.func @transform_10(%arg0: i32) -> (i32, i32) {
    %c0_i32 = arith.constant 0 : i32
    %c0_i32_0 = arith.constant 0 : i32
    %c0_i32_1 = arith.constant 0 : i32
    return %c0_i32, %c0_i32_0 : i32, i32
  }
  func.func @transform_11(%arg0: i32) -> (i32, i32) {
    %c0_i32 = arith.constant 0 : i32
    %c0_i32_0 = arith.constant 0 : i32
    %c0_i32_1 = arith.constant 0 : i32
    return %c0_i32, %c0_i32_0 : i32, i32
  }
  func.func @transform_12(%arg0: i32) -> (i32, i32) {
    %c0_i32 = arith.constant 0 : i32
    %c0_i32_0 = arith.constant 0 : i32
    %c0_i32_1 = arith.constant 0 : i32
    return %c0_i32, %c0_i32_0 : i32, i32
  }
  func.func @transform_13(%arg0: i32) -> (i32, i32, i32) {
    %c0_i32 = arith.constant 0 : i32
    %c0_i32_0 = arith.constant 0 : i32
    %c0_i32_1 = arith.constant 0 : i32
    return %arg0, %c0_i32, %c0_i32_0 : i32, i32, i32
  }
}

</mosaic_0001>

<llo_original>
// kernel: actor_forward.1
$region0: #{actor_forward.1}
  #allocation0 [shape = 'u32[]', space=smem, size = 0x4, offset = 0x4, fixed_abs, tag = 'smem constant byte address 0x4 - core index']
  #allocation1 [shape = 'u32[144,128]{1,0:T(1,128)}', space=vmem, size = 0x12000, scoped, tag = 'internal scratch']
  #allocation2 [shape = 'bf16[18,48]{1,0:T(8,128)(2,1)}', space=vmem, size = 0x1800, scoped, tag = 'scratch operand']
  #allocation3 [shape = 'bf16[10,128]{1,0:T(8,128)(2,1)}', space=vmem, size = 0x1000, scoped, tag = 'scratch operand']
  %s0 = inlined_call_operand.vmem [shape: f32[2,16,48], index: 0, kind: input, shape index: {}]
  %s1 = inlined_call_operand.hbm [shape: bf16[3,48,256], index: 1, kind: input, shape index: {}]
  %s2 = inlined_call_operand.vmem [shape: f32[1,256], index: 2, kind: input, shape index: {}]
  %s3 = inlined_call_operand.hbm [shape: bf16[3,128,256], index: 3, kind: input, shape index: {}]
  %s4 = inlined_call_operand.vmem [shape: f32[1,256], index: 4, kind: input, shape index: {}]
  %s5 = inlined_call_operand.vmem [shape: bf16[2,8,16], index: 5, kind: input, shape index: {}]
  %s6 = inlined_call_operand.vmem [shape: bf16[2,256,128], index: 6, kind: input, shape index: {}]
  %s7 = inlined_call_operand.vmem [shape: bf16[2,4,8], index: 7, kind: input, shape index: {}]
  %s8 = inlined_call_operand.hbm [shape: bf16[2,256,128], index: 8, kind: input, shape index: {}]
  %s9 = inlined_call_operand.hbm [shape: bf16[512,128], index: 9, kind: input, shape index: {}]
  %s10 = inlined_call_operand.vmem [shape: f32[1,128], index: 10, kind: input, shape index: {}]
  %s11 = inlined_call_operand.vmem [shape: bf16[128,128], index: 11, kind: input, shape index: {}]
  %s12 = inlined_call_operand.vmem [shape: f32[1,128], index: 12, kind: input, shape index: {}]
  %s13 = inlined_call_operand.hbm [shape: f32[2,1,128], index: 13, kind: output, shape index: {}]
  %s14 = sld [smem:[#allocation0]]
  $region101: #{actor_forward.1} parent=0
    _
  %s16 = ssub.s32 1, %s14
  %s17 = scalar_select 0, %s16, %s14
  $region1: #{actor_forward.1} parent=0
    #allocation4 [shape = 'u8[73728]{0}', space=vmem, size = 0x12000, scoped, tag = 'input window, operand 1, single buffered']
    #allocation5 [shape = 's32[2]{0}', space=sflag, size = 0x8, scoped, tag = 'scoped memory for actor_forward.1']
    #allocation6 [shape = 's32[2]{0}', space=sflag, size = 0x8, scoped, tag = 'scoped memory for actor_forward.1']
    #allocation7 [shape = 'u8[196608]{0}', space=vmem, size = 0x30000, scoped, tag = 'input window, operand 3, single buffered']
    #allocation8 [shape = 's32[1]{0}', space=sflag, size = 0x4, scoped, tag = 'scoped memory for actor_forward.1']
    #allocation9 [shape = 'u8[131072]{0}', space=vmem, size = 0x20000, scoped, tag = 'input window, operand 8, single buffered']
    #allocation10 [shape = 'u8[131072]{0}', space=vmem, size = 0x20000, scoped, tag = 'input window, operand 9, single buffered']
    #allocation11 [shape = 's32[1]{0}', space=sflag, size = 0x4, scoped, tag = 'scoped memory for actor_forward.1']
    #allocation12 [shape = 'u8[1024]{0}', space=vmem, size = 0x400, scoped, tag = 'output window, operand 0']
    %18 = vsyncpa [#allocation5], 0
    %19 = vsyncpa [#allocation8], 0
    %20 = vsyncpa [#allocation11], 0
    %21 = vsyncpa [#allocation6], 0
    %s22 = scalar_lea.sflag [#allocation6], 1
    %23 = vsyncpa %s22, 0
    loop: start=0, step=1, limit=4
    $region2: #{actor_forward.1} parent=1 // loop_pre_header
      _
    $region3: #{actor_forward.1} parent=1 // loop_header
      %s25 = sphi 0, %s29
      %p26 = scmp.ge.s32.totalorder %s25, 4
      %s35 = sphi 0, %s37
      %s38 = sphi 0, %s35
      %s39 = sphi 0, %s38
      %s55 = sphi 0, %s39
      %s59 = sphi 0, %s59
      %s61 = sphi 0, %s59
      %s62 = sphi 0, %s61
      %s76 = sphi 0, %s62
      %s80 = sphi 0, %s80
      %s82 = sphi 0, %s80
      %s83 = sphi 0, %s82
      %s97 = sphi 0, %s83
      %s101 = sphi 0, %s101
      %s103 = sphi 0, %s101
      %s104 = sphi 0, %s103
      %s118 = sphi 0, %s104
      %s122 = sphi 0, %s122
      %s124 = sphi 0, %s122
      %s125 = sphi 0, %s124
      %s139 = sphi 0, %s125
      %s143 = sphi 0, %s143
      %s145 = sphi 0, %s143
      %s146 = sphi 0, %s145
      %s160 = sphi 0, %s146
      %s164 = sphi 0, %s164
      %s166 = sphi 0, %s164
      %s167 = sphi 0, %s166
      %s181 = sphi 0, %s167
      %s185 = sphi 0, %s185
      %s187 = sphi 0, %s185
      %s188 = sphi 0, %s187
      %s202 = sphi 0, %s188
      %s206 = sphi 0, %s206
      %s208 = sphi 0, %s206
      %s209 = sphi 0, %s208
      %s223 = sphi 0, %s209
      %s227 = sphi 0, %s227
      %s229 = sphi 0, %s227
      %s230 = sphi 0, %s229
      %s244 = sphi 0, %s230
      %s248 = sphi 0, %s248
      %s250 = sphi 0, %s248
      %s251 = sphi 0, %s250
      %s265 = sphi 0, %s251
      %s269 = sphi 0, %s269
      %s271 = sphi 0, %s269
      %s272 = sphi 0, %s271
      %s286 = sphi 0, %s272
      %s290 = sphi 0, %s290
      %s292 = sphi 0, %s290
      %s293 = sphi 0, %s292
      %s307 = sphi 0, %s293
      %s313 = sphi 0, %s315
      %s316 = sphi 0, %s313
      %s317 = sphi 0, %s316
      %s333 = sphi 0, %s317
    $region4: #{actor_forward.1} parent=1 // loop_header_branch
      %28 = sbr.rel (%p26) target = $region8
    $region5: #{actor_forward.1} parent=1 // loop_body
      %s30 = ssub.s32 %s25, 1
      %s31 = ssub.s32 %s25, 2
      %s32 = sadd.s32 %s25, 1
      %s33 = ssub.s32 %s25, %s32
      %p34 = scmp.eq.s32.totalorder %s33, 0
      %s36 = sadd.s32 %s35, 1
      %s37 = scalar_select %p34, %s35, %s36
      %p40 = pneg %p34
      %p41 = scmp.eq.s32.totalorder %s25, 1
      %p42 = por %p40, %p41
      %p43 = scmp.ne.s32.totalorder %s35, %s38
      %p44 = scmp.eq.s32.totalorder %s25, 0
      %p45 = por %p43, %p44
      %p46 = scmp.ne.s32.totalorder %s35, %s38
      %p47 = scmp.eq.s32.totalorder %s30, 1
      %p48 = por %p46, %p47
      %p49 = scmp.ne.s32.totalorder %s38, %s39
      %p50 = scmp.eq.s32.totalorder %s30, 0
      %p51 = por %p49, %p50
      %p52 = scmp.ne.s32.totalorder %s38, %s39
      %p53 = scmp.eq.s32.totalorder %s31, 1
      %p54 = por %p52, %p53
      %p56 = scmp.ne.s32.totalorder %s39, %s55
      %p57 = scmp.eq.s32.totalorder %s31, 0
      %p58 = por %p56, %p57
      %s60 = sadd.s32 %s59, 1
      %p63 = scmp.eq.s32.totalorder %s25, 1
      %p64 = scmp.ne.s32.totalorder %s59, %s61
      %p65 = scmp.eq.s32.totalorder %s25, 0
      %p66 = por %p64, %p65
      %p67 = scmp.ne.s32.totalorder %s59, %s61
      %p68 = scmp.eq.s32.totalorder %s30, 1
      %p69 = por %p67, %p68
      %p70 = scmp.ne.s32.totalorder %s61, %s62
      %p71 = scmp.eq.s32.totalorder %s30, 0
      %p72 = por %p70, %p71
      %p73 = scmp.ne.s32.totalorder %s61, %s62
      %p74 = scmp.eq.s32.totalorder %s31, 1
      %p75 = por %p73, %p74
      %p77 = scmp.ne.s32.totalorder %s62, %s76
      %p78 = scmp.eq.s32.totalorder %s31, 0
      %p79 = por %p77, %p78
      %s81 = sadd.s32 %s80, 1
      %p84 = scmp.eq.s32.totalorder %s25, 1
      %p85 = scmp.ne.s32.totalorder %s80, %s82
      %p86 = scmp.eq.s32.totalorder %s25, 0
      %p87 = por %p85, %p86
      %p88 = scmp.ne.s32.totalorder %s80, %s82
      %p89 = scmp.eq.s32.totalorder %s30, 1
      %p90 = por %p88, %p89
      %p91 = scmp.ne.s32.totalorder %s82, %s83
      %p92 = scmp.eq.s32.totalorder %s30, 0
      %p93 = por %p91, %p92
      %p94 = scmp.ne.s32.totalorder %s82, %s83
      %p95 = scmp.eq.s32.totalorder %s31, 1
      %p96 = por %p94, %p95
      %p98 = scmp.ne.s32.totalorder %s83, %s97
      %p99 = scmp.eq.s32.totalorder %s31, 0
      %p100 = por %p98, %p99
      %s102 = sadd.s32 %s101, 1
      %p105 = scmp.eq.s32.totalorder %s25, 1
      %p106 = scmp.ne.s32.totalorder %s101, %s103
      %p107 = scmp.eq.s32.totalorder %s25, 0
      %p108 = por %p106, %p107
      %p109 = scmp.ne.s32.totalorder %s101, %s103
      %p110 = scmp.eq.s32.totalorder %s30, 1
      %p111 = por %p109, %p110
      %p112 = scmp.ne.s32.totalorder %s103, %s104
      %p113 = scmp.eq.s32.totalorder %s30, 0
      %p114 = por %p112, %p113
      %p115 = scmp.ne.s32.totalorder %s103, %s104
      %p116 = scmp.eq.s32.totalorder %s31, 1
      %p117 = por %p115, %p116
      %p119 = scmp.ne.s32.totalorder %s104, %s118
      %p120 = scmp.eq.s32.totalorder %s31, 0
      %p121 = por %p119, %p120
      %s123 = sadd.s32 %s122, 1
      %p126 = scmp.eq.s32.totalorder %s25, 1
      %p127 = scmp.ne.s32.totalorder %s122, %s124
      %p128 = scmp.eq.s32.totalorder %s25, 0
      %p129 = por %p127, %p128
      %p130 = scmp.ne.s32.totalorder %s122, %s124
      %p131 = scmp.eq.s32.totalorder %s30, 1
      %p132 = por %p130, %p131
      %p133 = scmp.ne.s32.totalorder %s124, %s125
      %p134 = scmp.eq.s32.totalorder %s30, 0
      %p135 = por %p133, %p134
      %p136 = scmp.ne.s32.totalorder %s124, %s125
      %p137 = scmp.eq.s32.totalorder %s31, 1
      %p138 = por %p136, %p137
      %p140 = scmp.ne.s32.totalorder %s125, %s139
      %p141 = scmp.eq.s32.totalorder %s31, 0
      %p142 = por %p140, %p141
      %s144 = sadd.s32 %s143, 1
      %p147 = scmp.eq.s32.totalorder %s25, 1
      %p148 = scmp.ne.s32.totalorder %s143, %s145
      %p149 = scmp.eq.s32.totalorder %s25, 0
      %p150 = por %p148, %p149
      %p151 = scmp.ne.s32.totalorder %s143, %s145
      %p152 = scmp.eq.s32.totalorder %s30, 1
      %p153 = por %p151, %p152
      %p154 = scmp.ne.s32.totalorder %s145, %s146
      %p155 = scmp.eq.s32.totalorder %s30, 0
      %p156 = por %p154, %p155
      %p157 = scmp.ne.s32.totalorder %s145, %s146
      %p158 = scmp.eq.s32.totalorder %s31, 1
      %p159 = por %p157, %p158
      %p161 = scmp.ne.s32.totalorder %s146, %s160
      %p162 = scmp.eq.s32.totalorder %s31, 0
      %p163 = por %p161, %p162
      %s165 = sadd.s32 %s164, 1
      %p168 = scmp.eq.s32.totalorder %s25, 1
      %p169 = scmp.ne.s32.totalorder %s164, %s166
      %p170 = scmp.eq.s32.totalorder %s25, 0
      %p171 = por %p169, %p170
      %p172 = scmp.ne.s32.totalorder %s164, %s166
      %p173 = scmp.eq.s32.totalorder %s30, 1
      %p174 = por %p172, %p173
      %p175 = scmp.ne.s32.totalorder %s166, %s167
      %p176 = scmp.eq.s32.totalorder %s30, 0
      %p177 = por %p175, %p176
      %p178 = scmp.ne.s32.totalorder %s166, %s167
      %p179 = scmp.eq.s32.totalorder %s31, 1
      %p180 = por %p178, %p179
      %p182 = scmp.ne.s32.totalorder %s167, %s181
      %p183 = scmp.eq.s32.totalorder %s31, 0
      %p184 = por %p182, %p183
      %s186 = sadd.s32 %s185, 1
      %p189 = scmp.eq.s32.totalorder %s25, 1
      %p190 = scmp.ne.s32.totalorder %s185, %s187
      %p191 = scmp.eq.s32.totalorder %s25, 0
      %p192 = por %p190, %p191
      %p193 = scmp.ne.s32.totalorder %s185, %s187
      %p194 = scmp.eq.s32.totalorder %s30, 1
      %p195 = por %p193, %p194
      %p196 = scmp.ne.s32.totalorder %s187, %s188
      %p197 = scmp.eq.s32.totalorder %s30, 0
      %p198 = por %p196, %p197
      %p199 = scmp.ne.s32.totalorder %s187, %s188
      %p200 = scmp.eq.s32.totalorder %s31, 1
      %p201 = por %p199, %p200
      %p203 = scmp.ne.s32.totalorder %s188, %s202
      %p204 = scmp.eq.s32.totalorder %s31, 0
      %p205 = por %p203, %p204
      %s207 = sadd.s32 %s206, 1
      %p210 = scmp.eq.s32.totalorder %s25, 1
      %p211 = scmp.ne.s32.totalorder %s206, %s208
      %p212 = scmp.eq.s32.totalorder %s25, 0
      %p213 = por %p211, %p212
      %p214 = scmp.ne.s32.totalorder %s206, %s208
      %p215 = scmp.eq.s32.totalorder %s30, 1
      %p216 = por %p214, %p215
      %p217 = scmp.ne.s32.totalorder %s208, %s209
      %p218 = scmp.eq.s32.totalorder %s30, 0
      %p219 = por %p217, %p218
      %p220 = scmp.ne.s32.totalorder %s208, %s209
      %p221 = scmp.eq.s32.totalorder %s31, 1
      %p222 = por %p220, %p221
      %p224 = scmp.ne.s32.totalorder %s209, %s223
      %p225 = scmp.eq.s32.totalorder %s31, 0
      %p226 = por %p224, %p225
      %s228 = sadd.s32 %s227, 1
      %p231 = scmp.eq.s32.totalorder %s25, 1
      %p232 = scmp.ne.s32.totalorder %s227, %s229
      %p233 = scmp.eq.s32.totalorder %s25, 0
      %p234 = por %p232, %p233
      %p235 = scmp.ne.s32.totalorder %s227, %s229
      %p236 = scmp.eq.s32.totalorder %s30, 1
      %p237 = por %p235, %p236
      %p238 = scmp.ne.s32.totalorder %s229, %s230
      %p239 = scmp.eq.s32.totalorder %s30, 0
      %p240 = por %p238, %p239
      %p241 = scmp.ne.s32.totalorder %s229, %s230
      %p242 = scmp.eq.s32.totalorder %s31, 1
      %p243 = por %p241, %p242
      %p245 = scmp.ne.s32.totalorder %s230, %s244
      %p246 = scmp.eq.s32.totalorder %s31, 0
      %p247 = por %p245, %p246
      %s249 = sadd.s32 %s248, 1
      %p252 = scmp.eq.s32.totalorder %s25, 1
      %p253 = scmp.ne.s32.totalorder %s248, %s250
      %p254 = scmp.eq.s32.totalorder %s25, 0
      %p255 = por %p253, %p254
      %p256 = scmp.ne.s32.totalorder %s248, %s250
      %p257 = scmp.eq.s32.totalorder %s30, 1
      %p258 = por %p256, %p257
      %p259 = scmp.ne.s32.totalorder %s250, %s251
      %p260 = scmp.eq.s32.totalorder %s30, 0
      %p261 = por %p259, %p260
      %p262 = scmp.ne.s32.totalorder %s250, %s251
      %p263 = scmp.eq.s32.totalorder %s31, 1
      %p264 = por %p262, %p263
      %p266 = scmp.ne.s32.totalorder %s251, %s265
      %p267 = scmp.eq.s32.totalorder %s31, 0
      %p268 = por %p266, %p267
      %s270 = sadd.s32 %s269, 1
      %p273 = scmp.eq.s32.totalorder %s25, 1
      %p274 = scmp.ne.s32.totalorder %s269, %s271
      %p275 = scmp.eq.s32.totalorder %s25, 0
      %p276 = por %p274, %p275
      %p277 = scmp.ne.s32.totalorder %s269, %s271
      %p278 = scmp.eq.s32.totalorder %s30, 1
      %p279 = por %p277, %p278
      %p280 = scmp.ne.s32.totalorder %s271, %s272
      %p281 = scmp.eq.s32.totalorder %s30, 0
      %p282 = por %p280, %p281
      %p283 = scmp.ne.s32.totalorder %s271, %s272
      %p284 = scmp.eq.s32.totalorder %s31, 1
      %p285 = por %p283, %p284
      %p287 = scmp.ne.s32.totalorder %s272, %s286
      %p288 = scmp.eq.s32.totalorder %s31, 0
      %p289 = por %p287, %p288
      %s291 = sadd.s32 %s290, 1
      %p294 = scmp.eq.s32.totalorder %s25, 1
      %p295 = scmp.ne.s32.totalorder %s290, %s292
      %p296 = scmp.eq.s32.totalorder %s25, 0
      %p297 = por %p295, %p296
      %p298 = scmp.ne.s32.totalorder %s290, %s292
      %p299 = scmp.eq.s32.totalorder %s30, 1
      %p300 = por %p298, %p299
      %p301 = scmp.ne.s32.totalorder %s292, %s293
      %p302 = scmp.eq.s32.totalorder %s30, 0
      %p303 = por %p301, %p302
      %p304 = scmp.ne.s32.totalorder %s292, %s293
      %p305 = scmp.eq.s32.totalorder %s31, 1
      %p306 = por %p304, %p305
      %p308 = scmp.ne.s32.totalorder %s293, %s307
      %p309 = scmp.eq.s32.totalorder %s31, 0
      %p310 = por %p308, %p309
      %s311 = ssub.s32 %s25, %s32
      %p312 = scmp.eq.s32.totalorder %s311, 0
      %s314 = sadd.s32 %s313, 1
      %s315 = scalar_select %p312, %s313, %s314
      %p318 = pneg %p312
      %p319 = scmp.eq.s32.totalorder %s25, 1
      %p320 = por %p318, %p319
      %p321 = scmp.ne.s32.totalorder %s313, %s316
      %p322 = scmp.eq.s32.totalorder %s25, 0
      %p323 = por %p321, %p322
      %p324 = scmp.ne.s32.totalorder %s313, %s316
      %p325 = scmp.eq.s32.totalorder %s30, 1
      %p326 = por %p324, %p325
      %p327 = scmp.ne.s32.totalorder %s316, %s317
      %p328 = scmp.eq.s32.totalorder %s30, 0
      %p329 = por %p327, %p328
      %p330 = scmp.ne.s32.totalorder %s316, %s317
      %p331 = scmp.eq.s32.totalorder %s31, 1
      %p332 = por %p330, %p331
      %p334 = scmp.ne.s32.totalorder %s317, %s333
      %p335 = scmp.eq.s32.totalorder %s31, 0
      %p336 = por %p334, %p335
      %p337 = scmp.le.s32.totalorder 1, %s25
      %p338 = scmp.lt.s32.totalorder %s25, 3
      %p339 = pnand %p337, %p338
      %p340 = pneg %p339
      // Predicated region
      $region9: #{actor_forward.1} parent=5 // pred_check
        _
      $region10: #{actor_forward.1} parent=5 // pred_check_branch
        %342 = sbr.rel (%p339) target = $region12
      $region11: #{actor_forward.1} parent=5 // pred_region
        %s343 = ssub.s32 %s25, 1
        // Predicated region
        $region13: #{actor_forward.1} parent=11 // pred_check
          %p344 = pneg %p72
        $region14: #{actor_forward.1} parent=11 // pred_check_branch
          %346 = sbr.rel (%p344) target = $region16
        $region15: #{actor_forward.1} parent=11 // pred_region
          %s348 = ssub.s32 2304, 2304
          %349 = vsyncadd [#allocation5], %s348
          %s350 = sshll.u32 [#allocation4], 4
          %s351 = int_to_ptr.vmem [resolvable:$true] %s350
          %356 = dma.hbm_to_vmem [thread:$0]  %s1, 2304, %s351, [#allocation5], 128, 128, 8
        $region16: #{actor_forward.1} parent=11 // pred_fallthru
          _
        // Predicated region
        $region17: #{actor_forward.1} parent=11 // pred_check
          %p357 = pneg %p93
        $region18: #{actor_forward.1} parent=11 // pred_check_branch
          %359 = sbr.rel (%p357) target = $region20
        $region19: #{actor_forward.1} parent=11 // pred_region
          _
        $region20: #{actor_forward.1} parent=11 // pred_fallthru
          _
        // Predicated region
        $region21: #{actor_forward.1} parent=11 // pred_check
          %p360 = pneg %p114
        $region22: #{actor_forward.1} parent=11 // pred_check_branch
          %362 = sbr.rel (%p360) target = $region24
        $region23: #{actor_forward.1} parent=11 // pred_region
          %s364 = ssub.s32 6144, 6144
          %365 = vsyncadd [#allocation8], %s364
          %s366 = sshll.u32 [#allocation7], 4
          %s367 = int_to_ptr.vmem [resolvable:$true] %s366
          %372 = dma.hbm_to_vmem [thread:$0]  %s3, 6144, %s367, [#allocation8], 128, 128, 8
        $region24: #{actor_forward.1} parent=11 // pred_fallthru
          _
        // Predicated region
        $region25: #{actor_forward.1} parent=11 // pred_check
          %p373 = pneg %p135
        $region26: #{actor_forward.1} parent=11 // pred_check_branch
          %375 = sbr.rel (%p373) target = $region28
        $region27: #{actor_forward.1} parent=11 // pred_region
          _
        $region28: #{actor_forward.1} parent=11 // pred_fallthru
          _
        // Predicated region
        $region29: #{actor_forward.1} parent=11 // pred_check
          %p376 = pneg %p156
        $region30: #{actor_forward.1} parent=11 // pred_check_branch
          %378 = sbr.rel (%p376) target = $region32
        $region31: #{actor_forward.1} parent=11 // pred_region
          _
        $region32: #{actor_forward.1} parent=11 // pred_fallthru
          _
        // Predicated region
        $region33: #{actor_forward.1} parent=11 // pred_check
          %p379 = pneg %p177
        $region34: #{actor_forward.1} parent=11 // pred_check_branch
          %381 = sbr.rel (%p379) target = $region36
        $region35: #{actor_forward.1} parent=11 // pred_region
          _
        $region36: #{actor_forward.1} parent=11 // pred_fallthru
          _
        // Predicated region
        $region37: #{actor_forward.1} parent=11 // pred_check
          %p382 = pneg %p198
        $region38: #{actor_forward.1} parent=11 // pred_check_branch
          %384 = sbr.rel (%p382) target = $region40
        $region39: #{actor_forward.1} parent=11 // pred_region
          _
        $region40: #{actor_forward.1} parent=11 // pred_fallthru
          _
        // Predicated region
        $region41: #{actor_forward.1} parent=11 // pred_check
          %p385 = pneg %p219
        $region42: #{actor_forward.1} parent=11 // pred_check_branch
          %387 = sbr.rel (%p385) target = $region44
        $region43: #{actor_forward.1} parent=11 // pred_region
          %s389 = ssub.s32 4096, 4096
          %390 = vsyncadd [#allocation8], %s389
          %s391 = sshll.u32 [#allocation9], 4
          %s392 = int_to_ptr.vmem [resolvable:$true] %s391
          %397 = dma.hbm_to_vmem [thread:$0]  %s8, 4096, %s392, [#allocation8], 64, 64, 4
        $region44: #{actor_forward.1} parent=11 // pred_fallthru
          _
        // Predicated region
        $region45: #{actor_forward.1} parent=11 // pred_check
          %p398 = pneg %p240
        $region46: #{actor_forward.1} parent=11 // pred_check_branch
          %400 = sbr.rel (%p398) target = $region48
        $region47: #{actor_forward.1} parent=11 // pred_region
          %s402 = ssub.s32 4096, 4096
          %403 = vsyncadd [#allocation11], %s402
          %s404 = sshll.u32 [#allocation10], 4
          %s405 = int_to_ptr.vmem [resolvable:$true] %s404
          %410 = dma.hbm_to_vmem [thread:$0]  %s9, 4096, %s405, [#allocation11], 64, 64, 4
        $region48: #{actor_forward.1} parent=11 // pred_fallthru
          _
        // Predicated region
        $region49: #{actor_forward.1} parent=11 // pred_check
          %p411 = pneg %p261
        $region50: #{actor_forward.1} parent=11 // pred_check_branch
          %413 = sbr.rel (%p411) target = $region52
        $region51: #{actor_forward.1} parent=11 // pred_region
          _
        $region52: #{actor_forward.1} parent=11 // pred_fallthru
          _
        // Predicated region
        $region53: #{actor_forward.1} parent=11 // pred_check
          %p414 = pneg %p282
        $region54: #{actor_forward.1} parent=11 // pred_check_branch
          %416 = sbr.rel (%p414) target = $region56
        $region55: #{actor_forward.1} parent=11 // pred_region
          _
        $region56: #{actor_forward.1} parent=11 // pred_fallthru
          _
        // Predicated region
        $region57: #{actor_forward.1} parent=11 // pred_check
          %p417 = pneg %p303
        $region58: #{actor_forward.1} parent=11 // pred_check_branch
          %419 = sbr.rel (%p417) target = $region60
        $region59: #{actor_forward.1} parent=11 // pred_region
          _
        $region60: #{actor_forward.1} parent=11 // pred_fallthru
          _
      $region12: #{actor_forward.1} parent=5 // pred_fallthru
        _
      %p420 = scmp.lt.s32.totalorder %s25, 2
      // Predicated region
      $region61: #{actor_forward.1} parent=5 // pred_check
        %p421 = pneg %p420
      $region62: #{actor_forward.1} parent=5 // pred_check_branch
        %423 = sbr.rel (%p421) target = $region64
      $region63: #{actor_forward.1} parent=5 // pred_region
        // Predicated region
        $region65: #{actor_forward.1} parent=63 // pred_check
          %p424 = pneg %p45
        $region66: #{actor_forward.1} parent=63 // pred_check_branch
          %426 = sbr.rel (%p424) target = $region68
        $region67: #{actor_forward.1} parent=63 // pred_region
          %p427 = scmp.lt.s32.totalorder %s25, 1
          %s428 = scalar_select %p427, %s25, 1
          %s429 = smul.addr %s428, 2
          %s430 = smul.addr %s429, 8
          %s431 = scalar_lea.vmem %s0, %s430
        $region68: #{actor_forward.1} parent=63 // pred_fallthru
          _
      $region64: #{actor_forward.1} parent=5 // pred_fallthru
        _
      %p432 = scmp.le.s32.totalorder 1, %s25
      %p433 = scmp.lt.s32.totalorder %s25, 3
      %p434 = pnand %p432, %p433
      %p435 = pneg %p434
      // Predicated region
      $region69: #{actor_forward.1} parent=5 // pred_check
        _
      $region70: #{actor_forward.1} parent=5 // pred_check_branch
        %437 = sbr.rel (%p434) target = $region72
      $region71: #{actor_forward.1} parent=5 // pred_region
        %s438 = ssub.s32 %s25, 1
        // Predicated region
        $region73: #{actor_forward.1} parent=71 // pred_check
          %p439 = pneg %p72
        $region74: #{actor_forward.1} parent=71 // pred_check_branch
          %441 = sbr.rel (%p439) target = $region76
        $region75: #{actor_forward.1} parent=71 // pred_region
          %442 = dma.done [#allocation5], 2304
        $region76: #{actor_forward.1} parent=71 // pred_fallthru
          _
        // Predicated region
        $region77: #{actor_forward.1} parent=71 // pred_check
          %p443 = pneg %p114
        $region78: #{actor_forward.1} parent=71 // pred_check_branch
          %445 = sbr.rel (%p443) target = $region80
        $region79: #{actor_forward.1} parent=71 // pred_region
          %446 = dma.done [#allocation8], 6144
        $region80: #{actor_forward.1} parent=71 // pred_fallthru
          _
        // Predicated region
        $region81: #{actor_forward.1} parent=71 // pred_check
          %p447 = pneg %p219
        $region82: #{actor_forward.1} parent=71 // pred_check_branch
          %449 = sbr.rel (%p447) target = $region84
        $region83: #{actor_forward.1} parent=71 // pred_region
          %450 = dma.done [#allocation8], 4096
        $region84: #{actor_forward.1} parent=71 // pred_fallthru
          _
        // Predicated region
        $region85: #{actor_forward.1} parent=71 // pred_check
          %p451 = pneg %p240
        $region86: #{actor_forward.1} parent=71 // pred_check_branch
          %453 = sbr.rel (%p451) target = $region88
        $region87: #{actor_forward.1} parent=71 // pred_region
          %454 = dma.done [#allocation11], 4096
        $region88: #{actor_forward.1} parent=71 // pred_fallthru
          _
        %p455 = scmp.lt.s32.totalorder %s30, 1
        %s456 = scalar_select %p455, %s30, 1
        %s457 = smul.addr %s456, 2
        %s458 = smul.addr %s457, 8
        %s459 = scalar_lea.vmem %s0, %s458
        %p460 = pneg %p51
        %p461 = pneg %p48
        %p462 = pneg %p72
        %p463 = pneg %p69
        %p464 = pneg %p93
        %p465 = pneg %p90
        %p466 = pneg %p114
        %p467 = pneg %p111
        %p468 = pneg %p135
        %p469 = pneg %p132
        %p470 = pneg %p156
        %p471 = pneg %p153
        %p472 = pneg %p177
        %p473 = pneg %p174
        %p474 = pneg %p198
        %p475 = pneg %p195
        %p476 = pneg %p219
        %p477 = pneg %p216
        %p478 = pneg %p240
        %p479 = pneg %p237
        %p480 = pneg %p261
        %p481 = pneg %p258
        %p482 = pneg %p282
        %p483 = pneg %p279
        %p484 = pneg %p303
        %p485 = pneg %p300
        %p486 = pneg %p329
        %p487 = pneg %p326
        %s488 = sand.u32 %s316, 1
        %s489 = scalar_lea.sflag [#allocation6], %s488
        %s490 = sand.u32 %s316, 1
        %s491 = scalar_lea.vmem [#allocation12], %s490
        %p492 = scmp.lt.s32.totalorder %s30, 1
        %s493 = scalar_select %p492, %s30, 1
        %s494 = smul.addr %s493, 2
        %s495 = smul.addr %s494, 8
        %s496 = scalar_lea.vmem %s0, %s495
        %vm498 = vcmask 388096
        %499 = vst.msk [vmem:[#allocation2] sm:$0xf] %vm498, 0
        %500 = vst.msk [vmem:[#allocation2 + $0x4] sm:$0xf] %vm498, 0
        %vm501 = vcmask 385024
        %502 = vst.msk [vmem:[#allocation2 + $0x8] sm:$0x1] %vm501, 0
        %v503 = vld [vmem:[%s496] sm:$0xff]
        %v504 = vld [vmem:[%s496 + $0x8] sm:$0xff]
        %v505 = vpack.c.bf16 %v504, %v503
        %v507 = vunpack.c.l.b16 %v505
        %v508 = vunpack.c.h.b16 %v505
        %v509 = vpack.c.b16 %v507, %v507
        %v510 = vpack.c.b16 %v508, %v508
        %vm511 = vsmask.f32 256
        %vm512 = vsmask.f32 4368
        %vm513 = vmor %vm511, %vm512
        %v515 = vshrl.u32 %v509, 16
        %v517 = vrot.slane %v515, 7
        %v518 = vshll.u32 %v509, 16
        %v520 = vor.u32 %v517, %v518
        %v521 = vrot.slane %v517, 4
        %v523 = vshrl.u32 %v510, 16
        %v525 = vrot.slane %v523, 7
        %v526 = vshll.u32 %v510, 16
        %v528 = vor.u32 %v525, %v526
        %v529 = vsel %vm513, %v521, %v528
        %v530 = vrot.slane %v525, 4
        %vm534 = vcmask 388096
        %vm535 = vsmask.f32 7938
        %vm536 = vmand %vm534, %vm535
        %v537 = vld [vmem:[#allocation2] sm:$0xf]
        %v538 = vsel %vm536, %v520, %v537
        %539 = vst [vmem:[#allocation2] sm:$0xf] %v538
        %540 = vst.msk [vmem:[#allocation2 + $0x4] sm:$0xf] %vm498, %v529
        %vm541 = vcmask 385024
        %vm542 = vmand %vm541, %vm511
        %v543 = vld [vmem:[#allocation2 + $0x8] sm:$0x1]
        %v544 = vsel %vm542, %v530, %v543
        %545 = vst [vmem:[#allocation2 + $0x8] sm:$0x1] %v544
        %v546 = vld [vmem:[#allocation2] sm:$0xf]
        %v547 = vld [vmem:[#allocation2 + $0x4] sm:$0xf]
        %v548 = vld [vmem:[#allocation4] sm:$0xff]
        %v549 = vld [vmem:[#allocation4 + $0x8] sm:$0xff]
        %v550 = vld [vmem:[#allocation4 + $0x10] sm:$0xff]
        %v551 = vld [vmem:[#allocation4 + $0x18] sm:$0xff]
        %v552 = vld [vmem:[#allocation4 + $0x20] sm:$0xff]
        %v553 = vld [vmem:[#allocation4 + $0x28] sm:$0xff]
        %v554 = vld [vmem:[#allocation2 + $0x8] sm:$0x1]
        %s555 = scalar_lea.vmem [#allocation4], 48
        %v556 = vld [vmem:[%s555] sm:$0xff]
        %v557 = vld [vmem:[%s555 + $0x8] sm:$0xff]
        %v558 = vld [vmem:[%s555 + $0x10] sm:$0xff]
        %v559 = vld [vmem:[%s555 + $0x18] sm:$0xff]
        %v560 = vld [vmem:[%s555 + $0x20] sm:$0xff]
        %v561 = vld [vmem:[%s555 + $0x28] sm:$0xff]
        %v565 = vunpack.c.l.b16 %v546
        %v566 = vunpack.c.l.b16 %v547
        %v567 = vunpack.c.l.b16 %v554
        %v568 = vpack.c.b16 %v566, %v565
        %v569 = vpack.c.b16 %v567, %v567
        %vm570 = vsmask.f32 7424
        %v572 = vshrl.u32 %v568, 16
        %v574 = vshll.u32 %v568, 16
        %v576 = vrot.slane %v574, 1
        %v577 = vor.u32 %v572, %v576
        %v579 = vshll.u32 %v569, 16
        %v581 = vrot.slane %v579, 1
        %v582 = vsel %vm570, %v577, %v581
        %v589 = vunpack.c.l.b16 %v556
        %v590 = vunpack.c.h.b16 %v556
        %v591 = vunpack.c.l.b16 %v557
        %v592 = vunpack.c.h.b16 %v557
        %v593 = vunpack.c.l.b16 %v558
        %v594 = vunpack.c.h.b16 %v558
        %v595 = vunpack.c.l.b16 %v559
        %v596 = vunpack.c.h.b16 %v559
        %v597 = vunpack.c.l.b16 %v560
        %v598 = vunpack.c.h.b16 %v560
        %v599 = vunpack.c.l.b16 %v561
        %v600 = vunpack.c.h.b16 %v561
        %v601 = vpack.c.b16 %v591, %v589
        %v602 = vpack.c.b16 %v592, %v590
        %v603 = vpack.c.b16 %v595, %v593
        %v604 = vpack.c.b16 %v596, %v594
        %v605 = vpack.c.b16 %v599, %v597
        %v606 = vpack.c.b16 %v600, %v598
        %vm613 = vcmask 392192
        %v615 = vsel %vm613, %v582, 0
        %617 = vmatprep.subr.bf16.mxu0 %v602
        %618 = vmatpush1.bf16.msra.mxu0 %v601
        %619 = vmatprep.subr.bf16.mxu0 %v604
        %620 = vmatpush1.bf16.msra.mxu0 %v603
        %621 = vmatprep.subr.bf16.mxu0 %v606
        %622 = vmatpush1.bf16.msra.mxu0 %v605
        %623 = vmatprep.subr.bf16.mxu0 0
        %624 = vmatpush1.bf16.msra.mxu0 0
        %625 = vmatprep.subr.bf16.mxu0 0
        %626 = vmatpush1.bf16.msra.mxu0 0
        %627 = vmatprep.subr.bf16.mxu0 0
        %628 = vmatpush1.bf16.msra.mxu0 0
        %629 = vmatprep.subr.bf16.mxu0 0
        %630 = vmatpush1.bf16.msra.mxu0 0
        %631 = vmatprep.subr.bf16.mxu0 0
        %632 = vmatpush1.bf16.msra.mxu0 0
        %633 = vmatprep.subr.bf16.mxu0 0
        %634 = vmatpush1.bf16.msra.mxu0 0
        %635 = vmatprep.subr.bf16.mxu0 0
        %636 = vmatpush1.bf16.msra.mxu0 0
        %637 = vmatprep.subr.bf16.mxu0 0
        %638 = vmatpush1.bf16.msra.mxu0 0
        %639 = vmatprep.subr.bf16.mxu0 0
        %640 = vmatpush1.bf16.msra.mxu0 0
        %641 = vmatprep.subr.bf16.mxu0 0
        %642 = vmatpush1.bf16.msra.mxu0 0
        %643 = vmatprep.subr.bf16.mxu0 0
        %644 = vmatpush1.bf16.msra.mxu0 0
        %645 = vmatprep.subr.bf16.mxu0 0
        %646 = vmatpush1.bf16.msra.mxu0 0
        %647 = vmatprep.subr.bf16.mxu0 0
        %648 = vmatpush1.bf16.msra.mxu0 0
        %649 = vmatprep.mubr.bf16.mxu0 0
        %650 = vmatmul.mubr.bf16.gmra.mrb[0].mxu0 %v615
        %v651 = vpop.f32.mrb[0].mxu0
        %v652 = vadd.f32 0.0, %v651
        %v653 = vpop.f32.mrb[0].mxu0
        %v654 = vadd.f32 0.0, %v653
        %v655 = vpop.f32.mrb[0].mxu0
        %v656 = vadd.f32 0.0, %v655
        %v657 = vpop.f32.mrb[0].mxu0
        %v658 = vadd.f32 0.0, %v657
        %659 = vdwg.mxu0
        %v666 = vunpack.c.l.b16 %v548
        %v667 = vunpack.c.h.b16 %v548
        %v668 = vunpack.c.l.b16 %v549
        %v669 = vunpack.c.h.b16 %v549
        %v670 = vunpack.c.l.b16 %v550
        %v671 = vunpack.c.h.b16 %v550
        %v672 = vunpack.c.l.b16 %v551
        %v673 = vunpack.c.h.b16 %v551
        %v674 = vunpack.c.l.b16 %v552
        %v675 = vunpack.c.h.b16 %v552
        %v676 = vunpack.c.l.b16 %v553
        %v677 = vunpack.c.h.b16 %v553
        %v678 = vpack.c.b16 %v668, %v666
        %v679 = vpack.c.b16 %v669, %v667
        %v680 = vpack.c.b16 %v672, %v670
        %v681 = vpack.c.b16 %v673, %v671
        %v682 = vpack.c.b16 %v676, %v674
        %v683 = vpack.c.b16 %v677, %v675
        %v690 = vsel %vm613, %v568, 0
        %692 = vmatprep.subr.bf16.mxu0 %v679
        %693 = vmatpush1.bf16.msra.mxu0 %v678
        %694 = vmatprep.subr.bf16.mxu0 %v681
        %695 = vmatpush1.bf16.msra.mxu0 %v680
        %696 = vmatprep.subr.bf16.mxu0 %v683
        %697 = vmatpush1.bf16.msra.mxu0 %v682
        %698 = vmatprep.subr.bf16.mxu0 0
        %699 = vmatpush1.bf16.msra.mxu0 0
        %700 = vmatprep.subr.bf16.mxu0 0
        %701 = vmatpush1.bf16.msra.mxu0 0
        %702 = vmatprep.subr.bf16.mxu0 0
        %703 = vmatpush1.bf16.msra.mxu0 0
        %704 = vmatprep.subr.bf16.mxu0 0
        %705 = vmatpush1.bf16.msra.mxu0 0
        %706 = vmatprep.subr.bf16.mxu0 0
        %707 = vmatpush1.bf16.msra.mxu0 0
        %708 = vmatprep.subr.bf16.mxu0 0
        %709 = vmatpush1.bf16.msra.mxu0 0
        %710 = vmatprep.subr.bf16.mxu0 0
        %711 = vmatpush1.bf16.msra.mxu0 0
        %712 = vmatprep.subr.bf16.mxu0 0
        %713 = vmatpush1.bf16.msra.mxu0 0
        %714 = vmatprep.subr.bf16.mxu0 0
        %715 = vmatpush1.bf16.msra.mxu0 0
        %716 = vmatprep.subr.bf16.mxu0 0
        %717 = vmatpush1.bf16.msra.mxu0 0
        %718 = vmatprep.subr.bf16.mxu0 0
        %719 = vmatpush1.bf16.msra.mxu0 0
        %720 = vmatprep.subr.bf16.mxu0 0
        %721 = vmatpush1.bf16.msra.mxu0 0
        %722 = vmatprep.subr.bf16.mxu0 0
        %723 = vmatpush1.bf16.msra.mxu0 0
        %724 = vmatprep.mubr.bf16.mxu0 0
        %725 = vmatmul.mubr.bf16.gmra.mrb[0].mxu0 %v690
        %v726 = vpop.f32.mrb[0].mxu0
        %v727 = vadd.f32 %v652, %v726
        %v728 = vpop.f32.mrb[0].mxu0
        %v729 = vadd.f32 %v654, %v728
        %v730 = vpop.f32.mrb[0].mxu0
        %v731 = vadd.f32 %v656, %v730
        %v732 = vpop.f32.mrb[0].mxu0
        %v733 = vadd.f32 %v658, %v732
        %734 = vdwg.mxu0
        %v735 = vld [vmem:[#allocation2] sm:$0xe]
        %s736 = scalar_lea.vmem [#allocation4], 96
        %v737 = vld [vmem:[%s736] sm:$0xff]
        %v738 = vld [vmem:[%s736 + $0x8] sm:$0xff]
        %v739 = vld [vmem:[%s736 + $0x10] sm:$0xff]
        %v740 = vld [vmem:[%s736 + $0x18] sm:$0xff]
        %v741 = vld [vmem:[%s736 + $0x20] sm:$0xff]
        %v742 = vld [vmem:[%s736 + $0x28] sm:$0xff]
        %v744 = vunpack.c.l.b16 %v735
        %v745 = vpack.c.b16 %v566, %v744
        %vm746 = vcmask 1046528
        %v747 = vrot.slane %v745, 1
        %v748 = vrot.slane %v569, 1
        %v749 = vsel %vm746, %v747, %v748
        %v756 = vunpack.c.l.b16 %v737
        %v757 = vunpack.c.h.b16 %v737
        %v758 = vunpack.c.l.b16 %v738
        %v759 = vunpack.c.h.b16 %v738
        %v760 = vunpack.c.l.b16 %v739
        %v761 = vunpack.c.h.b16 %v739
        %v762 = vunpack.c.l.b16 %v740
        %v763 = vunpack.c.h.b16 %v740
        %v764 = vunpack.c.l.b16 %v741
        %v765 = vunpack.c.h.b16 %v741
        %v766 = vunpack.c.l.b16 %v742
        %v767 = vunpack.c.h.b16 %v742
        %v768 = vpack.c.b16 %v758, %v756
        %v769 = vpack.c.b16 %v759, %v757
        %v770 = vpack.c.b16 %v762, %v760
        %v771 = vpack.c.b16 %v763, %v761
        %v772 = vpack.c.b16 %v766, %v764
        %v773 = vpack.c.b16 %v767, %v765
        %v781 = vsel %vm613, %v749, 0
        %783 = vmatprep.subr.bf16.mxu0 %v769
        %784 = vmatpush1.bf16.msra.mxu0 %v768
        %785 = vmatprep.subr.bf16.mxu0 %v771
        %786 = vmatpush1.bf16.msra.mxu0 %v770
        %787 = vmatprep.subr.bf16.mxu0 %v773
        %788 = vmatpush1.bf16.msra.mxu0 %v772
        %789 = vmatprep.subr.bf16.mxu0 0
        %790 = vmatpush1.bf16.msra.mxu0 0
        %791 = vmatprep.subr.bf16.mxu0 0
        %792 = vmatpush1.bf16.msra.mxu0 0
        %793 = vmatprep.subr.bf16.mxu0 0
        %794 = vmatpush1.bf16.msra.mxu0 0
        %795 = vmatprep.subr.bf16.mxu0 0
        %796 = vmatpush1.bf16.msra.mxu0 0
        %797 = vmatprep.subr.bf16.mxu0 0
        %798 = vmatpush1.bf16.msra.mxu0 0
        %799 = vmatprep.subr.bf16.mxu0 0
        %800 = vmatpush1.bf16.msra.mxu0 0
        %801 = vmatprep.subr.bf16.mxu0 0
        %802 = vmatpush1.bf16.msra.mxu0 0
        %803 = vmatprep.subr.bf16.mxu0 0
        %804 = vmatpush1.bf16.msra.mxu0 0
        %805 = vmatprep.subr.bf16.mxu0 0
        %806 = vmatpush1.bf16.msra.mxu0 0
        %807 = vmatprep.subr.bf16.mxu0 0
        %808 = vmatpush1.bf16.msra.mxu0 0
        %809 = vmatprep.subr.bf16.mxu0 0
        %810 = vmatpush1.bf16.msra.mxu0 0
        %811 = vmatprep.subr.bf16.mxu0 0
        %812 = vmatpush1.bf16.msra.mxu0 0
        %813 = vmatprep.subr.bf16.mxu0 0
        %814 = vmatpush1.bf16.msra.mxu0 0
        %815 = vmatprep.mubr.bf16.mxu0 0
        %816 = vmatmul.mubr.bf16.gmra.mrb[0].mxu0 %v781
        %v817 = vpop.f32.mrb[0].mxu0
        %v818 = vadd.f32 0.0, %v817
        %v819 = vpop.f32.mrb[0].mxu0
        %v820 = vadd.f32 0.0, %v819
        %v821 = vpop.f32.mrb[0].mxu0
        %v822 = vadd.f32 0.0, %v821
        %v823 = vpop.f32.mrb[0].mxu0
        %v824 = vadd.f32 0.0, %v823
        %825 = vdwg.mxu0
        %v826 = vadd.f32 %v727, %v818
        %v827 = vadd.f32 %v729, %v820
        %v828 = vadd.f32 %v731, %v822
        %v829 = vadd.f32 %v733, %v824
        %v830 = vld [vmem:[%s2] sm:$0x3]
        %v832 = vlaneseq
        %v833 = vshrl.u32 %v832, 7
        %v834 = vsub.s32 0, %v833
        %v835 = vrot.slane %v830, %v834
        %v836 = vlaneseq
        %v837 = vshrl.u32 %v836, 7
        %v838 = vsub.s32 1, %v837
        %v839 = vrot.slane %v830, %v838
        %v842 = vadd.f32 %v826, %v835
        %v843 = vadd.f32 %v827, %v839
        %v844 = vadd.f32 %v828, %v835
        %v845 = vadd.f32 %v829, %v839
        %v846 = vmax.f32 %v842, 0.0
        %v847 = vmax.f32 %v843, 0.0
        %v848 = vmax.f32 %v844, 0.0
        %v849 = vmax.f32 %v845, 0.0
        %v850 = vpack.c.bf16 %v848, %v846
        %v851 = vpack.c.bf16 %v849, %v847
        %v852 = vld [vmem:[%s5] sm:$0xf]
        %vm853 = vcmask 130048
        %v855 = vsel %vm853, %v852, 0
        %857 = vmatprep.subr.bf16.mxu0 %v851
        %858 = vmatpush1.bf16.msra.mxu0 %v850
        %859 = vmatprep.subr.bf16.mxu0 0
        %860 = vmatpush1.bf16.msra.mxu0 0
        %861 = vmatprep.subr.bf16.mxu0 0
        %862 = vmatpush1.bf16.msra.mxu0 0
        %863 = vmatprep.subr.bf16.mxu0 0
        %864 = vmatpush1.bf16.msra.mxu0 0
        %865 = vmatprep.subr.bf16.mxu0 0
        %866 = vmatpush1.bf16.msra.mxu0 0
        %867 = vmatprep.subr.bf16.mxu0 0
        %868 = vmatpush1.bf16.msra.mxu0 0
        %869 = vmatprep.subr.bf16.mxu0 0
        %870 = vmatpush1.bf16.msra.mxu0 0
        %871 = vmatprep.subr.bf16.mxu0 0
        %872 = vmatpush1.bf16.msra.mxu0 0
        %873 = vmatprep.subr.bf16.mxu0 0
        %874 = vmatpush1.bf16.msra.mxu0 0
        %875 = vmatprep.subr.bf16.mxu0 0
        %876 = vmatpush1.bf16.msra.mxu0 0
        %877 = vmatprep.subr.bf16.mxu0 0
        %878 = vmatpush1.bf16.msra.mxu0 0
        %879 = vmatprep.subr.bf16.mxu0 0
        %880 = vmatpush1.bf16.msra.mxu0 0
        %881 = vmatprep.subr.bf16.mxu0 0
        %882 = vmatpush1.bf16.msra.mxu0 0
        %883 = vmatprep.subr.bf16.mxu0 0
        %884 = vmatpush1.bf16.msra.mxu0 0
        %885 = vmatprep.subr.bf16.mxu0 0
        %886 = vmatpush1.bf16.msra.mxu0 0
        %887 = vmatprep.subr.bf16.mxu0 0
        %888 = vmatpush1.bf16.msra.mxu0 0
        %889 = vmatprep.mubr.bf16.mxu0 0
        %890 = vmatmul.mubr.bf16.gmra.mrb[0].mxu0 %v855
        %v891 = vpop.f32.mrb[0].mxu0
        %v892 = vadd.f32 0.0, %v891
        %v893 = vpop.f32.mrb[0].mxu0
        %v894 = vadd.f32 0.0, %v893
        %v895 = vpop.f32.mrb[0].mxu0
        %v896 = vpop.f32.mrb[0].mxu0
        %897 = vdwg.mxu0
        %s898 = scalar_lea.vmem %s5, 4
        %v899 = vld [vmem:[%s898] sm:$0xf]
        %v901 = vsel %vm853, %v899, 0
        %903 = vmatprep.subr.bf16.mxu0 %v851
        %904 = vmatpush1.bf16.msra.mxu0 %v850
        %905 = vmatprep.subr.bf16.mxu0 0
        %906 = vmatpush1.bf16.msra.mxu0 0
        %907 = vmatprep.subr.bf16.mxu0 0
        %908 = vmatpush1.bf16.msra.mxu0 0
        %909 = vmatprep.subr.bf16.mxu0 0
        %910 = vmatpush1.bf16.msra.mxu0 0
        %911 = vmatprep.subr.bf16.mxu0 0
        %912 = vmatpush1.bf16.msra.mxu0 0
        %913 = vmatprep.subr.bf16.mxu0 0
        %914 = vmatpush1.bf16.msra.mxu0 0
        %915 = vmatprep.subr.bf16.mxu0 0
        %916 = vmatpush1.bf16.msra.mxu0 0
        %917 = vmatprep.subr.bf16.mxu0 0
        %918 = vmatpush1.bf16.msra.mxu0 0
        %919 = vmatprep.subr.bf16.mxu0 0
        %920 = vmatpush1.bf16.msra.mxu0 0
        %921 = vmatprep.subr.bf16.mxu0 0
        %922 = vmatpush1.bf16.msra.mxu0 0
        %923 = vmatprep.subr.bf16.mxu0 0
        %924 = vmatpush1.bf16.msra.mxu0 0
        %925 = vmatprep.subr.bf16.mxu0 0
        %926 = vmatpush1.bf16.msra.mxu0 0
        %927 = vmatprep.subr.bf16.mxu0 0
        %928 = vmatpush1.bf16.msra.mxu0 0
        %929 = vmatprep.subr.bf16.mxu0 0
        %930 = vmatpush1.bf16.msra.mxu0 0
        %931 = vmatprep.subr.bf16.mxu0 0
        %932 = vmatpush1.bf16.msra.mxu0 0
        %933 = vmatprep.subr.bf16.mxu0 0
        %934 = vmatpush1.bf16.msra.mxu0 0
        %935 = vmatprep.mubr.bf16.mxu0 0
        %936 = vmatmul.mubr.bf16.gmra.mrb[0].mxu0 %v901
        %v937 = vpop.f32.mrb[0].mxu0
        %v938 = vadd.f32 0.0, %v937
        %v939 = vpop.f32.mrb[0].mxu0
        %v940 = vadd.f32 0.0, %v939
        %v941 = vpop.f32.mrb[0].mxu0
        %v942 = vpop.f32.mrb[0].mxu0
        %943 = vdwg.mxu0
        %v944 = vmax.f32 %v892, %v938
        %v945 = vmax.f32 %v894, %v940
        %v946 = vpack.c.bf16 %v944, %v944
        %v947 = vpack.c.bf16 %v945, %v945
        %v948 = vld [vmem:[%s6] sm:$0xf]
        %v949 = vld [vmem:[%s6 + $0x4] sm:$0xf]
        %v950 = vld [vmem:[%s6 + $0x8] sm:$0xf]
        %v951 = vld [vmem:[%s6 + $0xc] sm:$0xf]
        %v952 = vld [vmem:[%s6 + $0x10] sm:$0xf]
        %v953 = vld [vmem:[%s6 + $0x14] sm:$0xf]
        %v954 = vld [vmem:[%s6 + $0x18] sm:$0xf]
        %v955 = vld [vmem:[%s6 + $0x1c] sm:$0xf]
        %v956 = vld [vmem:[%s6 + $0x20] sm:$0xf]
        %v957 = vld [vmem:[%s6 + $0x24] sm:$0xf]
        %v958 = vld [vmem:[%s6 + $0x28] sm:$0xf]
        %v959 = vld [vmem:[%s6 + $0x2c] sm:$0xf]
        %v960 = vld [vmem:[%s6 + $0x30] sm:$0xf]
        %v961 = vld [vmem:[%s6 + $0x34] sm:$0xf]
        %v962 = vld [vmem:[%s6 + $0x38] sm:$0xf]
        %v963 = vld [vmem:[%s6 + $0x3c] sm:$0xf]
        %v964 = vld [vmem:[%s6 + $0x40] sm:$0xf]
        %v965 = vld [vmem:[%s6 + $0x44] sm:$0xf]
        %v966 = vld [vmem:[%s6 + $0x48] sm:$0xf]
        %v967 = vld [vmem:[%s6 + $0x4c] sm:$0xf]
        %v968 = vld [vmem:[%s6 + $0x50] sm:$0xf]
        %v969 = vld [vmem:[%s6 + $0x54] sm:$0xf]
        %v970 = vld [vmem:[%s6 + $0x58] sm:$0xf]
        %v971 = vld [vmem:[%s6 + $0x5c] sm:$0xf]
        %v972 = vld [vmem:[%s6 + $0x60] sm:$0xf]
        %v973 = vld [vmem:[%s6 + $0x64] sm:$0xf]
        %v974 = vld [vmem:[%s6 + $0x68] sm:$0xf]
        %v975 = vld [vmem:[%s6 + $0x6c] sm:$0xf]
        %v976 = vld [vmem:[%s6 + $0x70] sm:$0xf]
        %v977 = vld [vmem:[%s6 + $0x74] sm:$0xf]
        %v978 = vld [vmem:[%s6 + $0x78] sm:$0xf]
        %v979 = vld [vmem:[%s6 + $0x7c] sm:$0xf]
        %v1012 = vunpack.c.l.b16 %v948
        %v1013 = vunpack.c.l.b16 %v949
        %v1014 = vunpack.c.l.b16 %v950
        %v1015 = vunpack.c.l.b16 %v951
        %v1016 = vunpack.c.l.b16 %v952
        %v1017 = vunpack.c.l.b16 %v953
        %v1018 = vunpack.c.l.b16 %v954
        %v1019 = vunpack.c.l.b16 %v955
        %v1020 = vunpack.c.l.b16 %v956
        %v1021 = vunpack.c.l.b16 %v957
        %v1022 = vunpack.c.l.b16 %v958
        %v1023 = vunpack.c.l.b16 %v959
        %v1024 = vunpack.c.l.b16 %v960
        %v1025 = vunpack.c.l.b16 %v961
        %v1026 = vunpack.c.l.b16 %v962
        %v1027 = vunpack.c.l.b16 %v963
        %v1028 = vunpack.c.l.b16 %v964
        %v1029 = vunpack.c.l.b16 %v965
        %v1030 = vunpack.c.l.b16 %v966
        %v1031 = vunpack.c.l.b16 %v967
        %v1032 = vunpack.c.l.b16 %v968
        %v1033 = vunpack.c.l.b16 %v969
        %v1034 = vunpack.c.l.b16 %v970
        %v1035 = vunpack.c.l.b16 %v971
        %v1036 = vunpack.c.l.b16 %v972
        %v1037 = vunpack.c.l.b16 %v973
        %v1038 = vunpack.c.l.b16 %v974
        %v1039 = vunpack.c.l.b16 %v975
        %v1040 = vunpack.c.l.b16 %v976
        %v1041 = vunpack.c.l.b16 %v977
        %v1042 = vunpack.c.l.b16 %v978
        %v1043 = vunpack.c.l.b16 %v979
        %v1044 = vpack.c.b16 %v1013, %v1012
        %v1045 = vpack.c.b16 %v1015, %v1014
        %v1046 = vpack.c.b16 %v1017, %v1016
        %v1047 = vpack.c.b16 %v1019, %v1018
        %v1048 = vpack.c.b16 %v1021, %v1020
        %v1049 = vpack.c.b16 %v1023, %v1022
        %v1050 = vpack.c.b16 %v1025, %v1024
        %v1051 = vpack.c.b16 %v1027, %v1026
        %v1052 = vpack.c.b16 %v1029, %v1028
        %v1053 = vpack.c.b16 %v1031, %v1030
        %v1054 = vpack.c.b16 %v1033, %v1032
        %v1055 = vpack.c.b16 %v1035, %v1034
        %v1056 = vpack.c.b16 %v1037, %v1036
        %v1057 = vpack.c.b16 %v1039, %v1038
        %v1058 = vpack.c.b16 %v1041, %v1040
        %v1059 = vpack.c.b16 %v1043, %v1042
        %1076 = vmatprep.subr.bf16.mxu0 0
        %1077 = vmatpush1.bf16.msra.mxu0 %v1044
        %1078 = vmatprep.subr.bf16.mxu0 0
        %1079 = vmatpush1.bf16.msra.mxu0 %v1045
        %1080 = vmatprep.subr.bf16.mxu0 0
        %1081 = vmatpush1.bf16.msra.mxu0 %v1046
        %1082 = vmatprep.subr.bf16.mxu0 0
        %1083 = vmatpush1.bf16.msra.mxu0 %v1047
        %1084 = vmatprep.subr.bf16.mxu0 0
        %1085 = vmatpush1.bf16.msra.mxu0 %v1048
        %1086 = vmatprep.subr.bf16.mxu0 0
        %1087 = vmatpush1.bf16.msra.mxu0 %v1049
        %1088 = vmatprep.subr.bf16.mxu0 0
        %1089 = vmatpush1.bf16.msra.mxu0 %v1050
        %1090 = vmatprep.subr.bf16.mxu0 0
        %1091 = vmatpush1.bf16.msra.mxu0 %v1051
        %1092 = vmatprep.subr.bf16.mxu0 0
        %1093 = vmatpush1.bf16.msra.mxu0 %v1052
        %1094 = vmatprep.subr.bf16.mxu0 0
        %1095 = vmatpush1.bf16.msra.mxu0 %v1053
        %1096 = vmatprep.subr.bf16.mxu0 0
        %1097 = vmatpush1.bf16.msra.mxu0 %v1054
        %1098 = vmatprep.subr.bf16.mxu0 0
        %1099 = vmatpush1.bf16.msra.mxu0 %v1055
        %1100 = vmatprep.subr.bf16.mxu0 0
        %1101 = vmatpush1.bf16.msra.mxu0 %v1056
        %1102 = vmatprep.subr.bf16.mxu0 0
        %1103 = vmatpush1.bf16.msra.mxu0 %v1057
        %1104 = vmatprep.subr.bf16.mxu0 0
        %1105 = vmatpush1.bf16.msra.mxu0 %v1058
        %1106 = vmatprep.subr.bf16.mxu0 0
        %1107 = vmatpush1.bf16.msra.mxu0 %v1059
        %1108 = vmatprep.mubr.bf16.mxu0 %v947
        %1109 = vmatmul.mubr.bf16.gmra.mrb[0].mxu0 %v946
        %v1110 = vpop.f32.mrb[0].mxu0
        %v1111 = vadd.f32 0.0, %v1110
        %v1112 = vpop.f32.mrb[0].mxu0
        %v1113 = vpop.f32.mrb[0].mxu0
        %v1114 = vpop.f32.mrb[0].mxu0
        %1115 = vdwg.mxu0
        %s1116 = scalar_lea.vmem %s6, 128
        %v1117 = vld [vmem:[%s1116] sm:$0xf]
        %v1118 = vld [vmem:[%s1116 + $0x4] sm:$0xf]
        %v1119 = vld [vmem:[%s1116 + $0x8] sm:$0xf]
        %v1120 = vld [vmem:[%s1116 + $0xc] sm:$0xf]
        %v1121 = vld [vmem:[%s1116 + $0x10] sm:$0xf]
        %v1122 = vld [vmem:[%s1116 + $0x14] sm:$0xf]
        %v1123 = vld [vmem:[%s1116 + $0x18] sm:$0xf]
        %v1124 = vld [vmem:[%s1116 + $0x1c] sm:$0xf]
        %v1125 = vld [vmem:[%s1116 + $0x20] sm:$0xf]
        %v1126 = vld [vmem:[%s1116 + $0x24] sm:$0xf]
        %v1127 = vld [vmem:[%s1116 + $0x28] sm:$0xf]
        %v1128 = vld [vmem:[%s1116 + $0x2c] sm:$0xf]
        %v1129 = vld [vmem:[%s1116 + $0x30] sm:$0xf]
        %v1130 = vld [vmem:[%s1116 + $0x34] sm:$0xf]
        %v1131 = vld [vmem:[%s1116 + $0x38] sm:$0xf]
        %v1132 = vld [vmem:[%s1116 + $0x3c] sm:$0xf]
        %v1133 = vld [vmem:[%s1116 + $0x40] sm:$0xf]
        %v1134 = vld [vmem:[%s1116 + $0x44] sm:$0xf]
        %v1135 = vld [vmem:[%s1116 + $0x48] sm:$0xf]
        %v1136 = vld [vmem:[%s1116 + $0x4c] sm:$0xf]
        %v1137 = vld [vmem:[%s1116 + $0x50] sm:$0xf]
        %v1138 = vld [vmem:[%s1116 + $0x54] sm:$0xf]
        %v1139 = vld [vmem:[%s1116 + $0x58] sm:$0xf]
        %v1140 = vld [vmem:[%s1116 + $0x5c] sm:$0xf]
        %v1141 = vld [vmem:[%s1116 + $0x60] sm:$0xf]
        %v1142 = vld [vmem:[%s1116 + $0x64] sm:$0xf]
        %v1143 = vld [vmem:[%s1116 + $0x68] sm:$0xf]
        %v1144 = vld [vmem:[%s1116 + $0x6c] sm:$0xf]
        %v1145 = vld [vmem:[%s1116 + $0x70] sm:$0xf]
        %v1146 = vld [vmem:[%s1116 + $0x74] sm:$0xf]
        %v1147 = vld [vmem:[%s1116 + $0x78] sm:$0xf]
        %v1148 = vld [vmem:[%s1116 + $0x7c] sm:$0xf]
        %v1181 = vunpack.c.l.b16 %v1117
        %v1182 = vunpack.c.l.b16 %v1118
        %v1183 = vunpack.c.l.b16 %v1119
        %v1184 = vunpack.c.l.b16 %v1120
        %v1185 = vunpack.c.l.b16 %v1121
        %v1186 = vunpack.c.l.b16 %v1122
        %v1187 = vunpack.c.l.b16 %v1123
        %v1188 = vunpack.c.l.b16 %v1124
        %v1189 = vunpack.c.l.b16 %v1125
        %v1190 = vunpack.c.l.b16 %v1126
        %v1191 = vunpack.c.l.b16 %v1127
        %v1192 = vunpack.c.l.b16 %v1128
        %v1193 = vunpack.c.l.b16 %v1129
        %v1194 = vunpack.c.l.b16 %v1130
        %v1195 = vunpack.c.l.b16 %v1131
        %v1196 = vunpack.c.l.b16 %v1132
        %v1197 = vunpack.c.l.b16 %v1133
        %v1198 = vunpack.c.l.b16 %v1134
        %v1199 = vunpack.c.l.b16 %v1135
        %v1200 = vunpack.c.l.b16 %v1136
        %v1201 = vunpack.c.l.b16 %v1137
        %v1202 = vunpack.c.l.b16 %v1138
        %v1203 = vunpack.c.l.b16 %v1139
        %v1204 = vunpack.c.l.b16 %v1140
        %v1205 = vunpack.c.l.b16 %v1141
        %v1206 = vunpack.c.l.b16 %v1142
        %v1207 = vunpack.c.l.b16 %v1143
        %v1208 = vunpack.c.l.b16 %v1144
        %v1209 = vunpack.c.l.b16 %v1145
        %v1210 = vunpack.c.l.b16 %v1146
        %v1211 = vunpack.c.l.b16 %v1147
        %v1212 = vunpack.c.l.b16 %v1148
        %v1213 = vpack.c.b16 %v1182, %v1181
        %v1214 = vpack.c.b16 %v1184, %v1183
        %v1215 = vpack.c.b16 %v1186, %v1185
        %v1216 = vpack.c.b16 %v1188, %v1187
        %v1217 = vpack.c.b16 %v1190, %v1189
        %v1218 = vpack.c.b16 %v1192, %v1191
        %v1219 = vpack.c.b16 %v1194, %v1193
        %v1220 = vpack.c.b16 %v1196, %v1195
        %v1221 = vpack.c.b16 %v1198, %v1197
        %v1222 = vpack.c.b16 %v1200, %v1199
        %v1223 = vpack.c.b16 %v1202, %v1201
        %v1224 = vpack.c.b16 %v1204, %v1203
        %v1225 = vpack.c.b16 %v1206, %v1205
        %v1226 = vpack.c.b16 %v1208, %v1207
        %v1227 = vpack.c.b16 %v1210, %v1209
        %v1228 = vpack.c.b16 %v1212, %v1211
        %1245 = vmatprep.subr.bf16.mxu0 0
        %1246 = vmatpush1.bf16.msra.mxu0 %v1213
        %1247 = vmatprep.subr.bf16.mxu0 0
        %1248 = vmatpush1.bf16.msra.mxu0 %v1214
        %1249 = vmatprep.subr.bf16.mxu0 0
        %1250 = vmatpush1.bf16.msra.mxu0 %v1215
        %1251 = vmatprep.subr.bf16.mxu0 0
        %1252 = vmatpush1.bf16.msra.mxu0 %v1216
        %1253 = vmatprep.subr.bf16.mxu0 0
        %1254 = vmatpush1.bf16.msra.mxu0 %v1217
        %1255 = vmatprep.subr.bf16.mxu0 0
        %1256 = vmatpush1.bf16.msra.mxu0 %v1218
        %1257 = vmatprep.subr.bf16.mxu0 0
        %1258 = vmatpush1.bf16.msra.mxu0 %v1219
        %1259 = vmatprep.subr.bf16.mxu0 0
        %1260 = vmatpush1.bf16.msra.mxu0 %v1220
        %1261 = vmatprep.subr.bf16.mxu0 0
        %1262 = vmatpush1.bf16.msra.mxu0 %v1221
        %1263 = vmatprep.subr.bf16.mxu0 0
        %1264 = vmatpush1.bf16.msra.mxu0 %v1222
        %1265 = vmatprep.subr.bf16.mxu0 0
        %1266 = vmatpush1.bf16.msra.mxu0 %v1223
        %1267 = vmatprep.subr.bf16.mxu0 0
        %1268 = vmatpush1.bf16.msra.mxu0 %v1224
        %1269 = vmatprep.subr.bf16.mxu0 0
        %1270 = vmatpush1.bf16.msra.mxu0 %v1225
        %1271 = vmatprep.subr.bf16.mxu0 0
        %1272 = vmatpush1.bf16.msra.mxu0 %v1226
        %1273 = vmatprep.subr.bf16.mxu0 0
        %1274 = vmatpush1.bf16.msra.mxu0 %v1227
        %1275 = vmatprep.subr.bf16.mxu0 0
        %1276 = vmatpush1.bf16.msra.mxu0 %v1228
        %1277 = vmatprep.mubr.bf16.mxu0 %v947
        %1278 = vmatmul.mubr.bf16.gmra.mrb[0].mxu0 %v946
        %v1279 = vpop.f32.mrb[0].mxu0
        %v1280 = vadd.f32 0.0, %v1279
        %v1281 = vpop.f32.mrb[0].mxu0
        %v1282 = vpop.f32.mrb[0].mxu0
        %v1283 = vpop.f32.mrb[0].mxu0
        %1284 = vdwg.mxu0
        %v1285 = vmax.f32 %v1111, %v1280
        %v1286 = vpack.c.bf16 %v1285, %v1285
        %1287 = vst [vmem:[#allocation3] sm:$0xf] 0
        %1288 = vst [vmem:[#allocation3 + $0x4] sm:$0x1] 0
        %v1290 = vunpack.c.l.b16 %v1286
        %v1291 = vpack.c.b16 %v1290, %v1290
        %v1293 = vshrl.u32 %v1291, 16
        %v1295 = vrot.slane %v1293, 7
        %v1296 = vshll.u32 %v1291, 16
        %v1298 = vor.u32 %v1295, %v1296
        %v1299 = vrot.slane %v1295, 4
        %vm1302 = vcmask 1043456
        %vm1303 = vmand %vm1302, %vm535
        %v1304 = vld [vmem:[#allocation3] sm:$0xf]
        %v1305 = vsel %vm1303, %v1298, %v1304
        %1306 = vst [vmem:[#allocation3] sm:$0xf] %v1305
        %vm1307 = vcmask 1040384
        %vm1308 = vmand %vm1307, %vm511
        %v1309 = vld [vmem:[#allocation3 + $0x4] sm:$0x1]
        %v1310 = vsel %vm1308, %v1299, %v1309
        %1311 = vst [vmem:[#allocation3 + $0x4] sm:$0x1] %v1310
        %v1312 = vld [vmem:[#allocation3] sm:$0xf]
        %v1313 = vld [vmem:[#allocation7] sm:$0xff]
        %v1314 = vld [vmem:[#allocation7 + $0x8] sm:$0xff]
        %v1315 = vld [vmem:[#allocation7 + $0x10] sm:$0xff]
        %v1316 = vld [vmem:[#allocation7 + $0x18] sm:$0xff]
        %v1317 = vld [vmem:[#allocation7 + $0x20] sm:$0xff]
        %v1318 = vld [vmem:[#allocation7 + $0x28] sm:$0xff]
        %v1319 = vld [vmem:[#allocation7 + $0x30] sm:$0xff]
        %v1320 = vld [vmem:[#allocation7 + $0x38] sm:$0xff]
        %v1321 = vld [vmem:[#allocation7 + $0x40] sm:$0xff]
        %v1322 = vld [vmem:[#allocation7 + $0x48] sm:$0xff]
        %v1323 = vld [vmem:[#allocation7 + $0x50] sm:$0xff]
        %v1324 = vld [vmem:[#allocation7 + $0x58] sm:$0xff]
        %v1325 = vld [vmem:[#allocation7 + $0x60] sm:$0xff]
        %v1326 = vld [vmem:[#allocation7 + $0x68] sm:$0xff]
        %v1327 = vld [vmem:[#allocation7 + $0x70] sm:$0xff]
        %v1328 = vld [vmem:[#allocation7 + $0x78] sm:$0xff]
        %v1329 = vld [vmem:[#allocation3 + $0x4] sm:$0x1]
        %s1330 = scalar_lea.vmem [#allocation7], 128
        %v1331 = vld [vmem:[%s1330] sm:$0xff]
        %v1332 = vld [vmem:[%s1330 + $0x8] sm:$0xff]
        %v1333 = vld [vmem:[%s1330 + $0x10] sm:$0xff]
        %v1334 = vld [vmem:[%s1330 + $0x18] sm:$0xff]
        %v1335 = vld [vmem:[%s1330 + $0x20] sm:$0xff]
        %v1336 = vld [vmem:[%s1330 + $0x28] sm:$0xff]
        %v1337 = vld [vmem:[%s1330 + $0x30] sm:$0xff]
        %v1338 = vld [vmem:[%s1330 + $0x38] sm:$0xff]
        %v1339 = vld [vmem:[%s1330 + $0x40] sm:$0xff]
        %v1340 = vld [vmem:[%s1330 + $0x48] sm:$0xff]
        %v1341 = vld [vmem:[%s1330 + $0x50] sm:$0xff]
        %v1342 = vld [vmem:[%s1330 + $0x58] sm:$0xff]
        %v1343 = vld [vmem:[%s1330 + $0x60] sm:$0xff]
        %v1344 = vld [vmem:[%s1330 + $0x68] sm:$0xff]
        %v1345 = vld [vmem:[%s1330 + $0x70] sm:$0xff]
        %v1346 = vld [vmem:[%s1330 + $0x78] sm:$0xff]
        %v1349 = vunpack.c.l.b16 %v1312
        %v1350 = vunpack.c.l.b16 %v1329
        %v1351 = vpack.c.b16 %v1350, %v1349
        %v1353 = vshrl.u32 %v1351, 16
        %v1355 = vshll.u32 %v1351, 16
        %v1357 = vrot.slane %v1355, 1
        %v1358 = vor.u32 %v1353, %v1357
        %v1376 = vunpack.c.l.b16 %v1331
        %v1377 = vunpack.c.h.b16 %v1331
        %v1378 = vunpack.c.l.b16 %v1332
        %v1379 = vunpack.c.h.b16 %v1332
        %v1380 = vunpack.c.l.b16 %v1333
        %v1381 = vunpack.c.h.b16 %v1333
        %v1382 = vunpack.c.l.b16 %v1334
        %v1383 = vunpack.c.h.b16 %v1334
        %v1384 = vunpack.c.l.b16 %v1335
        %v1385 = vunpack.c.h.b16 %v1335
        %v1386 = vunpack.c.l.b16 %v1336
        %v1387 = vunpack.c.h.b16 %v1336
        %v1388 = vunpack.c.l.b16 %v1337
        %v1389 = vunpack.c.h.b16 %v1337
        %v1390 = vunpack.c.l.b16 %v1338
        %v1391 = vunpack.c.h.b16 %v1338
        %v1392 = vunpack.c.l.b16 %v1339
        %v1393 = vunpack.c.h.b16 %v1339
        %v1394 = vunpack.c.l.b16 %v1340
        %v1395 = vunpack.c.h.b16 %v1340
        %v1396 = vunpack.c.l.b16 %v1341
        %v1397 = vunpack.c.h.b16 %v1341
        %v1398 = vunpack.c.l.b16 %v1342
        %v1399 = vunpack.c.h.b16 %v1342
        %v1400 = vunpack.c.l.b16 %v1343
        %v1401 = vunpack.c.h.b16 %v1343
        %v1402 = vunpack.c.l.b16 %v1344
        %v1403 = vunpack.c.h.b16 %v1344
        %v1404 = vunpack.c.l.b16 %v1345
        %v1405 = vunpack.c.h.b16 %v1345
        %v1406 = vunpack.c.l.b16 %v1346
        %v1407 = vunpack.c.h.b16 %v1346
        %v1408 = vpack.c.b16 %v1378, %v1376
        %v1409 = vpack.c.b16 %v1379, %v1377
        %v1410 = vpack.c.b16 %v1382, %v1380
        %v1411 = vpack.c.b16 %v1383, %v1381
        %v1412 = vpack.c.b16 %v1386, %v1384
        %v1413 = vpack.c.b16 %v1387, %v1385
        %v1414 = vpack.c.b16 %v1390, %v1388
        %v1415 = vpack.c.b16 %v1391, %v1389
        %v1416 = vpack.c.b16 %v1394, %v1392
        %v1417 = vpack.c.b16 %v1395, %v1393
        %v1418 = vpack.c.b16 %v1398, %v1396
        %v1419 = vpack.c.b16 %v1399, %v1397
        %v1420 = vpack.c.b16 %v1402, %v1400
        %v1421 = vpack.c.b16 %v1403, %v1401
        %v1422 = vpack.c.b16 %v1406, %v1404
        %v1423 = vpack.c.b16 %v1407, %v1405
        %1440 = vmatprep.subr.bf16.mxu0 %v1409
        %1441 = vmatpush1.bf16.msra.mxu0 %v1408
        %1442 = vmatprep.subr.bf16.mxu0 %v1411
        %1443 = vmatpush1.bf16.msra.mxu0 %v1410
        %1444 = vmatprep.subr.bf16.mxu0 %v1413
        %1445 = vmatpush1.bf16.msra.mxu0 %v1412
        %1446 = vmatprep.subr.bf16.mxu0 %v1415
        %1447 = vmatpush1.bf16.msra.mxu0 %v1414
        %1448 = vmatprep.subr.bf16.mxu0 %v1417
        %1449 = vmatpush1.bf16.msra.mxu0 %v1416
        %1450 = vmatprep.subr.bf16.mxu0 %v1419
        %1451 = vmatpush1.bf16.msra.mxu0 %v1418
        %1452 = vmatprep.subr.bf16.mxu0 %v1421
        %1453 = vmatpush1.bf16.msra.mxu0 %v1420
        %1454 = vmatprep.subr.bf16.mxu0 %v1423
        %1455 = vmatpush1.bf16.msra.mxu0 %v1422
        %1456 = vmatprep.subr.bf16.mxu0 0
        %1457 = vmatpush1.bf16.msra.mxu0 0
        %1458 = vmatprep.subr.bf16.mxu0 0
        %1459 = vmatpush1.bf16.msra.mxu0 0
        %1460 = vmatprep.subr.bf16.mxu0 0
        %1461 = vmatpush1.bf16.msra.mxu0 0
        %1462 = vmatprep.subr.bf16.mxu0 0
        %1463 = vmatpush1.bf16.msra.mxu0 0
        %1464 = vmatprep.subr.bf16.mxu0 0
        %1465 = vmatpush1.bf16.msra.mxu0 0
        %1466 = vmatprep.subr.bf16.mxu0 0
        %1467 = vmatpush1.bf16.msra.mxu0 0
        %1468 = vmatprep.subr.bf16.mxu0 0
        %1469 = vmatpush1.bf16.msra.mxu0 0
        %1470 = vmatprep.subr.bf16.mxu0 0
        %1471 = vmatpush1.bf16.msra.mxu0 0
        %1472 = vmatprep.mubr.bf16.mxu0 0
        %1473 = vmatmul.mubr.bf16.gmra.mrb[0].mxu0 %v1358
        %v1474 = vpop.f32.mrb[0].mxu0
        %v1475 = vadd.f32 0.0, %v1474
        %v1476 = vpop.f32.mrb[0].mxu0
        %v1477 = vadd.f32 0.0, %v1476
        %v1478 = vpop.f32.mrb[0].mxu0
        %v1479 = vpop.f32.mrb[0].mxu0
        %1480 = vdwg.mxu0
        %v1497 = vunpack.c.l.b16 %v1313
        %v1498 = vunpack.c.h.b16 %v1313
        %v1499 = vunpack.c.l.b16 %v1314
        %v1500 = vunpack.c.h.b16 %v1314
        %v1501 = vunpack.c.l.b16 %v1315
        %v1502 = vunpack.c.h.b16 %v1315
        %v1503 = vunpack.c.l.b16 %v1316
        %v1504 = vunpack.c.h.b16 %v1316
        %v1505 = vunpack.c.l.b16 %v1317
        %v1506 = vunpack.c.h.b16 %v1317
        %v1507 = vunpack.c.l.b16 %v1318
        %v1508 = vunpack.c.h.b16 %v1318
        %v1509 = vunpack.c.l.b16 %v1319
        %v1510 = vunpack.c.h.b16 %v1319
        %v1511 = vunpack.c.l.b16 %v1320
        %v1512 = vunpack.c.h.b16 %v1320
        %v1513 = vunpack.c.l.b16 %v1321
        %v1514 = vunpack.c.h.b16 %v1321
        %v1515 = vunpack.c.l.b16 %v1322
        %v1516 = vunpack.c.h.b16 %v1322
        %v1517 = vunpack.c.l.b16 %v1323
        %v1518 = vunpack.c.h.b16 %v1323
        %v1519 = vunpack.c.l.b16 %v1324
        %v1520 = vunpack.c.h.b16 %v1324
        %v1521 = vunpack.c.l.b16 %v1325
        %v1522 = vunpack.c.h.b16 %v1325
        %v1523 = vunpack.c.l.b16 %v1326
        %v1524 = vunpack.c.h.b16 %v1326
        %v1525 = vunpack.c.l.b16 %v1327
        %v1526 = vunpack.c.h.b16 %v1327
        %v1527 = vunpack.c.l.b16 %v1328
        %v1528 = vunpack.c.h.b16 %v1328
        %v1529 = vpack.c.b16 %v1499, %v1497
        %v1530 = vpack.c.b16 %v1500, %v1498
        %v1531 = vpack.c.b16 %v1503, %v1501
        %v1532 = vpack.c.b16 %v1504, %v1502
        %v1533 = vpack.c.b16 %v1507, %v1505
        %v1534 = vpack.c.b16 %v1508, %v1506
        %v1535 = vpack.c.b16 %v1511, %v1509
        %v1536 = vpack.c.b16 %v1512, %v1510
        %v1537 = vpack.c.b16 %v1515, %v1513
        %v1538 = vpack.c.b16 %v1516, %v1514
        %v1539 = vpack.c.b16 %v1519, %v1517
        %v1540 = vpack.c.b16 %v1520, %v1518
        %v1541 = vpack.c.b16 %v1523, %v1521
        %v1542 = vpack.c.b16 %v1524, %v1522
        %v1543 = vpack.c.b16 %v1527, %v1525
        %v1544 = vpack.c.b16 %v1528, %v1526
        %1561 = vmatprep.subr.bf16.mxu0 %v1530
        %1562 = vmatpush1.bf16.msra.mxu0 %v1529
        %1563 = vmatprep.subr.bf16.mxu0 %v1532
        %1564 = vmatpush1.bf16.msra.mxu0 %v1531
        %1565 = vmatprep.subr.bf16.mxu0 %v1534
        %1566 = vmatpush1.bf16.msra.mxu0 %v1533
        %1567 = vmatprep.subr.bf16.mxu0 %v1536
        %1568 = vmatpush1.bf16.msra.mxu0 %v1535
        %1569 = vmatprep.subr.bf16.mxu0 %v1538
        %1570 = vmatpush1.bf16.msra.mxu0 %v1537
        %1571 = vmatprep.subr.bf16.mxu0 %v1540
        %1572 = vmatpush1.bf16.msra.mxu0 %v1539
        %1573 = vmatprep.subr.bf16.mxu0 %v1542
        %1574 = vmatpush1.bf16.msra.mxu0 %v1541
        %1575 = vmatprep.subr.bf16.mxu0 %v1544
        %1576 = vmatpush1.bf16.msra.mxu0 %v1543
        %1577 = vmatprep.subr.bf16.mxu0 0
        %1578 = vmatpush1.bf16.msra.mxu0 0
        %1579 = vmatprep.subr.bf16.mxu0 0
        %1580 = vmatpush1.bf16.msra.mxu0 0
        %1581 = vmatprep.subr.bf16.mxu0 0
        %1582 = vmatpush1.bf16.msra.mxu0 0
        %1583 = vmatprep.subr.bf16.mxu0 0
        %1584 = vmatpush1.bf16.msra.mxu0 0
        %1585 = vmatprep.subr.bf16.mxu0 0
        %1586 = vmatpush1.bf16.msra.mxu0 0
        %1587 = vmatprep.subr.bf16.mxu0 0
        %1588 = vmatpush1.bf16.msra.mxu0 0
        %1589 = vmatprep.subr.bf16.mxu0 0
        %1590 = vmatpush1.bf16.msra.mxu0 0
        %1591 = vmatprep.subr.bf16.mxu0 0
        %1592 = vmatpush1.bf16.msra.mxu0 0
        %1593 = vmatprep.mubr.bf16.mxu0 0
        %1594 = vmatmul.mubr.bf16.gmra.mrb[0].mxu0 %v1312
        %v1595 = vpop.f32.mrb[0].mxu0
        %v1596 = vadd.f32 %v1475, %v1595
        %v1597 = vpop.f32.mrb[0].mxu0
        %v1598 = vadd.f32 %v1477, %v1597
        %v1599 = vpop.f32.mrb[0].mxu0
        %v1600 = vpop.f32.mrb[0].mxu0
        %1601 = vdwg.mxu0
        %v1602 = vld [vmem:[#allocation3] sm:$0xe]
        %s1603 = scalar_lea.vmem [#allocation7], 256
        %v1604 = vld [vmem:[%s1603] sm:$0xff]
        %v1605 = vld [vmem:[%s1603 + $0x8] sm:$0xff]
        %v1606 = vld [vmem:[%s1603 + $0x10] sm:$0xff]
        %v1607 = vld [vmem:[%s1603 + $0x18] sm:$0xff]
        %v1608 = vld [vmem:[%s1603 + $0x20] sm:$0xff]
        %v1609 = vld [vmem:[%s1603 + $0x28] sm:$0xff]
        %v1610 = vld [vmem:[%s1603 + $0x30] sm:$0xff]
        %v1611 = vld [vmem:[%s1603 + $0x38] sm:$0xff]
        %v1612 = vld [vmem:[%s1603 + $0x40] sm:$0xff]
        %v1613 = vld [vmem:[%s1603 + $0x48] sm:$0xff]
        %v1614 = vld [vmem:[%s1603 + $0x50] sm:$0xff]
        %v1615 = vld [vmem:[%s1603 + $0x58] sm:$0xff]
        %v1616 = vld [vmem:[%s1603 + $0x60] sm:$0xff]
        %v1617 = vld [vmem:[%s1603 + $0x68] sm:$0xff]
        %v1618 = vld [vmem:[%s1603 + $0x70] sm:$0xff]
        %v1619 = vld [vmem:[%s1603 + $0x78] sm:$0xff]
        %v1621 = vunpack.c.l.b16 %v1602
        %v1622 = vpack.c.b16 %v1350, %v1621
        %v1623 = vrot.slane %v1622, 1
        %v1641 = vunpack.c.l.b16 %v1604
        %v1642 = vunpack.c.h.b16 %v1604
        %v1643 = vunpack.c.l.b16 %v1605
        %v1644 = vunpack.c.h.b16 %v1605
        %v1645 = vunpack.c.l.b16 %v1606
        %v1646 = vunpack.c.h.b16 %v1606
        %v1647 = vunpack.c.l.b16 %v1607
        %v1648 = vunpack.c.h.b16 %v1607
        %v1649 = vunpack.c.l.b16 %v1608
        %v1650 = vunpack.c.h.b16 %v1608
        %v1651 = vunpack.c.l.b16 %v1609
        %v1652 = vunpack.c.h.b16 %v1609
        %v1653 = vunpack.c.l.b16 %v1610
        %v1654 = vunpack.c.h.b16 %v1610
        %v1655 = vunpack.c.l.b16 %v1611
        %v1656 = vunpack.c.h.b16 %v1611
        %v1657 = vunpack.c.l.b16 %v1612
        %v1658 = vunpack.c.h.b16 %v1612
        %v1659 = vunpack.c.l.b16 %v1613
        %v1660 = vunpack.c.h.b16 %v1613
        %v1661 = vunpack.c.l.b16 %v1614
        %v1662 = vunpack.c.h.b16 %v1614
        %v1663 = vunpack.c.l.b16 %v1615
        %v1664 = vunpack.c.h.b16 %v1615
        %v1665 = vunpack.c.l.b16 %v1616
        %v1666 = vunpack.c.h.b16 %v1616
        %v1667 = vunpack.c.l.b16 %v1617
        %v1668 = vunpack.c.h.b16 %v1617
        %v1669 = vunpack.c.l.b16 %v1618
        %v1670 = vunpack.c.h.b16 %v1618
        %v1671 = vunpack.c.l.b16 %v1619
        %v1672 = vunpack.c.h.b16 %v1619
        %v1673 = vpack.c.b16 %v1643, %v1641
        %v1674 = vpack.c.b16 %v1644, %v1642
        %v1675 = vpack.c.b16 %v1647, %v1645
        %v1676 = vpack.c.b16 %v1648, %v1646
        %v1677 = vpack.c.b16 %v1651, %v1649
        %v1678 = vpack.c.b16 %v1652, %v1650
        %v1679 = vpack.c.b16 %v1655, %v1653
        %v1680 = vpack.c.b16 %v1656, %v1654
        %v1681 = vpack.c.b16 %v1659, %v1657
        %v1682 = vpack.c.b16 %v1660, %v1658
        %v1683 = vpack.c.b16 %v1663, %v1661
        %v1684 = vpack.c.b16 %v1664, %v1662
        %v1685 = vpack.c.b16 %v1667, %v1665
        %v1686 = vpack.c.b16 %v1668, %v1666
        %v1687 = vpack.c.b16 %v1671, %v1669
        %v1688 = vpack.c.b16 %v1672, %v1670
        %1705 = vmatprep.subr.bf16.mxu0 %v1674
        %1706 = vmatpush1.bf16.msra.mxu0 %v1673
        %1707 = vmatprep.subr.bf16.mxu0 %v1676
        %1708 = vmatpush1.bf16.msra.mxu0 %v1675
        %1709 = vmatprep.subr.bf16.mxu0 %v1678
        %1710 = vmatpush1.bf16.msra.mxu0 %v1677
        %1711 = vmatprep.subr.bf16.mxu0 %v1680
        %1712 = vmatpush1.bf16.msra.mxu0 %v1679
        %1713 = vmatprep.subr.bf16.mxu0 %v1682
        %1714 = vmatpush1.bf16.msra.mxu0 %v1681
        %1715 = vmatprep.subr.bf16.mxu0 %v1684
        %1716 = vmatpush1.bf16.msra.mxu0 %v1683
        %1717 = vmatprep.subr.bf16.mxu0 %v1686
        %1718 = vmatpush1.bf16.msra.mxu0 %v1685
        %1719 = vmatprep.subr.bf16.mxu0 %v1688
        %1720 = vmatpush1.bf16.msra.mxu0 %v1687
        %1721 = vmatprep.subr.bf16.mxu0 0
        %1722 = vmatpush1.bf16.msra.mxu0 0
        %1723 = vmatprep.subr.bf16.mxu0 0
        %1724 = vmatpush1.bf16.msra.mxu0 0
        %1725 = vmatprep.subr.bf16.mxu0 0
        %1726 = vmatpush1.bf16.msra.mxu0 0
        %1727 = vmatprep.subr.bf16.mxu0 0
        %1728 = vmatpush1.bf16.msra.mxu0 0
        %1729 = vmatprep.subr.bf16.mxu0 0
        %1730 = vmatpush1.bf16.msra.mxu0 0
        %1731 = vmatprep.subr.bf16.mxu0 0
        %1732 = vmatpush1.bf16.msra.mxu0 0
        %1733 = vmatprep.subr.bf16.mxu0 0
        %1734 = vmatpush1.bf16.msra.mxu0 0
        %1735 = vmatprep.subr.bf16.mxu0 0
        %1736 = vmatpush1.bf16.msra.mxu0 0
        %1737 = vmatprep.mubr.bf16.mxu0 0
        %1738 = vmatmul.mubr.bf16.gmra.mrb[0].mxu0 %v1623
        %v1739 = vpop.f32.mrb[0].mxu0
        %v1740 = vadd.f32 0.0, %v1739
        %v1741 = vpop.f32.mrb[0].mxu0
        %v1742 = vadd.f32 0.0, %v1741
        %v1743 = vpop.f32.mrb[0].mxu0
        %v1744 = vpop.f32.mrb[0].mxu0
        %1745 = vdwg.mxu0
        %v1746 = vadd.f32 %v1596, %v1740
        %v1747 = vadd.f32 %v1598, %v1742
        %v1748 = vld [vmem:[%s4] sm:$0x3]
        %v1750 = vlaneseq
        %v1751 = vshrl.u32 %v1750, 7
        %v1752 = vsub.s32 0, %v1751
        %v1753 = vrot.slane %v1748, %v1752
        %v1754 = vlaneseq
        %v1755 = vshrl.u32 %v1754, 7
        %v1756 = vsub.s32 1, %v1755
        %v1757 = vrot.slane %v1748, %v1756
        %v1760 = vadd.f32 %v1746, %v1753
        %v1761 = vadd.f32 %v1747, %v1757
        %v1762 = vmax.f32 %v1760, 0.0
        %v1763 = vmax.f32 %v1761, 0.0
        %v1764 = vpack.c.bf16 %v1762, %v1762
        %v1765 = vpack.c.bf16 %v1763, %v1763
        %v1766 = vld [vmem:[%s7] sm:$0x3]
        %vm1767 = vcmask 64512
        %v1769 = vsel %vm1767, %v1766, 0
        %vm1771 = vcmask 1043456
        %v1773 = vsel %vm1771, %v1764, 0
        %v1776 = vsel %vm1771, %v1765, 0
        %1778 = vmatprep.subr.bf16.mxu0 %v1776
        %1779 = vmatpush1.bf16.msra.mxu0 %v1773
        %1780 = vmatprep.subr.bf16.mxu0 0
        %1781 = vmatpush1.bf16.msra.mxu0 0
        %1782 = vmatprep.subr.bf16.mxu0 0
        %1783 = vmatpush1.bf16.msra.mxu0 0
        %1784 = vmatprep.subr.bf16.mxu0 0
        %1785 = vmatpush1.bf16.msra.mxu0 0
        %1786 = vmatprep.subr.bf16.mxu0 0
        %1787 = vmatpush1.bf16.msra.mxu0 0
        %1788 = vmatprep.subr.bf16.mxu0 0
        %1789 = vmatpush1.bf16.msra.mxu0 0
        %1790 = vmatprep.subr.bf16.mxu0 0
        %1791 = vmatpush1.bf16.msra.mxu0 0
        %1792 = vmatprep.subr.bf16.mxu0 0
        %1793 = vmatpush1.bf16.msra.mxu0 0
        %1794 = vmatprep.subr.bf16.mxu0 0
        %1795 = vmatpush1.bf16.msra.mxu0 0
        %1796 = vmatprep.subr.bf16.mxu0 0
        %1797 = vmatpush1.bf16.msra.mxu0 0
        %1798 = vmatprep.subr.bf16.mxu0 0
        %1799 = vmatpush1.bf16.msra.mxu0 0
        %1800 = vmatprep.subr.bf16.mxu0 0
        %1801 = vmatpush1.bf16.msra.mxu0 0
        %1802 = vmatprep.subr.bf16.mxu0 0
        %1803 = vmatpush1.bf16.msra.mxu0 0
        %1804 = vmatprep.subr.bf16.mxu0 0
        %1805 = vmatpush1.bf16.msra.mxu0 0
        %1806 = vmatprep.subr.bf16.mxu0 0
        %1807 = vmatpush1.bf16.msra.mxu0 0
        %1808 = vmatprep.subr.bf16.mxu0 0
        %1809 = vmatpush1.bf16.msra.mxu0 0
        %1810 = vmatprep.mubr.bf16.mxu0 0
        %1811 = vmatmul.mubr.bf16.gmra.mrb[0].mxu0 %v1769
        %v1812 = vpop.f32.mrb[0].mxu0
        %v1813 = vadd.f32 0.0, %v1812
        %v1814 = vpop.f32.mrb[0].mxu0
        %v1815 = vadd.f32 0.0, %v1814
        %v1816 = vpop.f32.mrb[0].mxu0
        %v1817 = vpop.f32.mrb[0].mxu0
        %1818 = vdwg.mxu0
        %s1819 = scalar_lea.vmem %s7, 2
        %v1820 = vld [vmem:[%s1819] sm:$0x3]
        %v1822 = vsel %vm1767, %v1820, 0
        %1824 = vmatprep.subr.bf16.mxu0 %v1776
        %1825 = vmatpush1.bf16.msra.mxu0 %v1773
        %1826 = vmatprep.subr.bf16.mxu0 0
        %1827 = vmatpush1.bf16.msra.mxu0 0
        %1828 = vmatprep.subr.bf16.mxu0 0
        %1829 = vmatpush1.bf16.msra.mxu0 0
        %1830 = vmatprep.subr.bf16.mxu0 0
        %1831 = vmatpush1.bf16.msra.mxu0 0
        %1832 = vmatprep.subr.bf16.mxu0 0
        %1833 = vmatpush1.bf16.msra.mxu0 0
        %1834 = vmatprep.subr.bf16.mxu0 0
        %1835 = vmatpush1.bf16.msra.mxu0 0
        %1836 = vmatprep.subr.bf16.mxu0 0
        %1837 = vmatpush1.bf16.msra.mxu0 0
        %1838 = vmatprep.subr.bf16.mxu0 0
        %1839 = vmatpush1.bf16.msra.mxu0 0
        %1840 = vmatprep.subr.bf16.mxu0 0
        %1841 = vmatpush1.bf16.msra.mxu0 0
        %1842 = vmatprep.subr.bf16.mxu0 0
        %1843 = vmatpush1.bf16.msra.mxu0 0
        %1844 = vmatprep.subr.bf16.mxu0 0
        %1845 = vmatpush1.bf16.msra.mxu0 0
        %1846 = vmatprep.subr.bf16.mxu0 0
        %1847 = vmatpush1.bf16.msra.mxu0 0
        %1848 = vmatprep.subr.bf16.mxu0 0
        %1849 = vmatpush1.bf16.msra.mxu0 0
        %1850 = vmatprep.subr.bf16.mxu0 0
        %1851 = vmatpush1.bf16.msra.mxu0 0
        %1852 = vmatprep.subr.bf16.mxu0 0
        %1853 = vmatpush1.bf16.msra.mxu0 0
        %1854 = vmatprep.subr.bf16.mxu0 0
        %1855 = vmatpush1.bf16.msra.mxu0 0
        %1856 = vmatprep.mubr.bf16.mxu0 0
        %1857 = vmatmul.mubr.bf16.gmra.mrb[0].mxu0 %v1822
        %v1858 = vpop.f32.mrb[0].mxu0
        %v1859 = vadd.f32 0.0, %v1858
        %v1860 = vpop.f32.mrb[0].mxu0
        %v1861 = vadd.f32 0.0, %v1860
        %v1862 = vpop.f32.mrb[0].mxu0
        %v1863 = vpop.f32.mrb[0].mxu0
        %1864 = vdwg.mxu0
        %v1865 = vmax.f32 %v1813, %v1859
        %v1866 = vmax.f32 %v1815, %v1861
        %v1867 = vpack.c.bf16 %v1865, %v1865
        %v1868 = vpack.c.bf16 %v1866, %v1866
        %v1869 = vld [vmem:[#allocation9] sm:$0xf]
        %v1870 = vld [vmem:[#allocation9 + $0x4] sm:$0xf]
        %v1871 = vld [vmem:[#allocation9 + $0x8] sm:$0xf]
        %v1872 = vld [vmem:[#allocation9 + $0xc] sm:$0xf]
        %v1873 = vld [vmem:[#allocation9 + $0x10] sm:$0xf]
        %v1874 = vld [vmem:[#allocation9 + $0x14] sm:$0xf]
        %v1875 = vld [vmem:[#allocation9 + $0x18] sm:$0xf]
        %v1876 = vld [vmem:[#allocation9 + $0x1c] sm:$0xf]
        %v1877 = vld [vmem:[#allocation9 + $0x20] sm:$0xf]
        %v1878 = vld [vmem:[#allocation9 + $0x24] sm:$0xf]
        %v1879 = vld [vmem:[#allocation9 + $0x28] sm:$0xf]
        %v1880 = vld [vmem:[#allocation9 + $0x2c] sm:$0xf]
        %v1881 = vld [vmem:[#allocation9 + $0x30] sm:$0xf]
        %v1882 = vld [vmem:[#allocation9 + $0x34] sm:$0xf]
        %v1883 = vld [vmem:[#allocation9 + $0x38] sm:$0xf]
        %v1884 = vld [vmem:[#allocation9 + $0x3c] sm:$0xf]
        %v1885 = vld [vmem:[#allocation9 + $0x40] sm:$0xf]
        %v1886 = vld [vmem:[#allocation9 + $0x44] sm:$0xf]
        %v1887 = vld [vmem:[#allocation9 + $0x48] sm:$0xf]
        %v1888 = vld [vmem:[#allocation9 + $0x4c] sm:$0xf]
        %v1889 = vld [vmem:[#allocation9 + $0x50] sm:$0xf]
        %v1890 = vld [vmem:[#allocation9 + $0x54] sm:$0xf]
        %v1891 = vld [vmem:[#allocation9 + $0x58] sm:$0xf]
        %v1892 = vld [vmem:[#allocation9 + $0x5c] sm:$0xf]
        %v1893 = vld [vmem:[#allocation9 + $0x60] sm:$0xf]
        %v1894 = vld [vmem:[#allocation9 + $0x64] sm:$0xf]
        %v1895 = vld [vmem:[#allocation9 + $0x68] sm:$0xf]
        %v1896 = vld [vmem:[#allocation9 + $0x6c] sm:$0xf]
        %v1897 = vld [vmem:[#allocation9 + $0x70] sm:$0xf]
        %v1898 = vld [vmem:[#allocation9 + $0x74] sm:$0xf]
        %v1899 = vld [vmem:[#allocation9 + $0x78] sm:$0xf]
        %v1900 = vld [vmem:[#allocation9 + $0x7c] sm:$0xf]
        %v1933 = vunpack.c.l.b16 %v1869
        %v1934 = vunpack.c.l.b16 %v1870
        %v1935 = vunpack.c.l.b16 %v1871
        %v1936 = vunpack.c.l.b16 %v1872
        %v1937 = vunpack.c.l.b16 %v1873
        %v1938 = vunpack.c.l.b16 %v1874
        %v1939 = vunpack.c.l.b16 %v1875
        %v1940 = vunpack.c.l.b16 %v1876
        %v1941 = vunpack.c.l.b16 %v1877
        %v1942 = vunpack.c.l.b16 %v1878
        %v1943 = vunpack.c.l.b16 %v1879
        %v1944 = vunpack.c.l.b16 %v1880
        %v1945 = vunpack.c.l.b16 %v1881
        %v1946 = vunpack.c.l.b16 %v1882
        %v1947 = vunpack.c.l.b16 %v1883
        %v1948 = vunpack.c.l.b16 %v1884
        %v1949 = vunpack.c.l.b16 %v1885
        %v1950 = vunpack.c.l.b16 %v1886
        %v1951 = vunpack.c.l.b16 %v1887
        %v1952 = vunpack.c.l.b16 %v1888
        %v1953 = vunpack.c.l.b16 %v1889
        %v1954 = vunpack.c.l.b16 %v1890
        %v1955 = vunpack.c.l.b16 %v1891
        %v1956 = vunpack.c.l.b16 %v1892
        %v1957 = vunpack.c.l.b16 %v1893
        %v1958 = vunpack.c.l.b16 %v1894
        %v1959 = vunpack.c.l.b16 %v1895
        %v1960 = vunpack.c.l.b16 %v1896
        %v1961 = vunpack.c.l.b16 %v1897
        %v1962 = vunpack.c.l.b16 %v1898
        %v1963 = vunpack.c.l.b16 %v1899
        %v1964 = vunpack.c.l.b16 %v1900
        %v1965 = vpack.c.b16 %v1934, %v1933
        %v1966 = vpack.c.b16 %v1936, %v1935
        %v1967 = vpack.c.b16 %v1938, %v1937
        %v1968 = vpack.c.b16 %v1940, %v1939
        %v1969 = vpack.c.b16 %v1942, %v1941
        %v1970 = vpack.c.b16 %v1944, %v1943
        %v1971 = vpack.c.b16 %v1946, %v1945
        %v1972 = vpack.c.b16 %v1948, %v1947
        %v1973 = vpack.c.b16 %v1950, %v1949
        %v1974 = vpack.c.b16 %v1952, %v1951
        %v1975 = vpack.c.b16 %v1954, %v1953
        %v1976 = vpack.c.b16 %v1956, %v1955
        %v1977 = vpack.c.b16 %v1958, %v1957
        %v1978 = vpack.c.b16 %v1960, %v1959
        %v1979 = vpack.c.b16 %v1962, %v1961
        %v1980 = vpack.c.b16 %v1964, %v1963
        %1997 = vmatprep.subr.bf16.mxu0 0
        %1998 = vmatpush1.bf16.msra.mxu0 %v1965
        %1999 = vmatprep.subr.bf16.mxu0 0
        %2000 = vmatpush1.bf16.msra.mxu0 %v1966
        %2001 = vmatprep.subr.bf16.mxu0 0
        %2002 = vmatpush1.bf16.msra.mxu0 %v1967
        %2003 = vmatprep.subr.bf16.mxu0 0
        %2004 = vmatpush1.bf16.msra.mxu0 %v1968
        %2005 = vmatprep.subr.bf16.mxu0 0
        %2006 = vmatpush1.bf16.msra.mxu0 %v1969
        %2007 = vmatprep.subr.bf16.mxu0 0
        %2008 = vmatpush1.bf16.msra.mxu0 %v1970
        %2009 = vmatprep.subr.bf16.mxu0 0
        %2010 = vmatpush1.bf16.msra.mxu0 %v1971
        %2011 = vmatprep.subr.bf16.mxu0 0
        %2012 = vmatpush1.bf16.msra.mxu0 %v1972
        %2013 = vmatprep.subr.bf16.mxu0 0
        %2014 = vmatpush1.bf16.msra.mxu0 %v1973
        %2015 = vmatprep.subr.bf16.mxu0 0
        %2016 = vmatpush1.bf16.msra.mxu0 %v1974
        %2017 = vmatprep.subr.bf16.mxu0 0
        %2018 = vmatpush1.bf16.msra.mxu0 %v1975
        %2019 = vmatprep.subr.bf16.mxu0 0
        %2020 = vmatpush1.bf16.msra.mxu0 %v1976
        %2021 = vmatprep.subr.bf16.mxu0 0
        %2022 = vmatpush1.bf16.msra.mxu0 %v1977
        %2023 = vmatprep.subr.bf16.mxu0 0
        %2024 = vmatpush1.bf16.msra.mxu0 %v1978
        %2025 = vmatprep.subr.bf16.mxu0 0
        %2026 = vmatpush1.bf16.msra.mxu0 %v1979
        %2027 = vmatprep.subr.bf16.mxu0 0
        %2028 = vmatpush1.bf16.msra.mxu0 %v1980
        %2029 = vmatprep.mubr.bf16.mxu0 %v1868
        %2030 = vmatmul.mubr.bf16.gmra.mrb[0].mxu0 %v1867
        %v2031 = vpop.f32.mrb[0].mxu0
        %v2032 = vadd.f32 0.0, %v2031
        %v2033 = vpop.f32.mrb[0].mxu0
        %v2034 = vpop.f32.mrb[0].mxu0
        %v2035 = vpop.f32.mrb[0].mxu0
        %2036 = vdwg.mxu0
        %s2037 = scalar_lea.vmem [#allocation9], 128
        %v2038 = vld [vmem:[%s2037] sm:$0xf]
        %v2039 = vld [vmem:[%s2037 + $0x4] sm:$0xf]
        %v2040 = vld [vmem:[%s2037 + $0x8] sm:$0xf]
        %v2041 = vld [vmem:[%s2037 + $0xc] sm:$0xf]
        %v2042 = vld [vmem:[%s2037 + $0x10] sm:$0xf]
        %v2043 = vld [vmem:[%s2037 + $0x14] sm:$0xf]
        %v2044 = vld [vmem:[%s2037 + $0x18] sm:$0xf]
        %v2045 = vld [vmem:[%s2037 + $0x1c] sm:$0xf]
        %v2046 = vld [vmem:[%s2037 + $0x20] sm:$0xf]
        %v2047 = vld [vmem:[%s2037 + $0x24] sm:$0xf]
        %v2048 = vld [vmem:[%s2037 + $0x28] sm:$0xf]
        %v2049 = vld [vmem:[%s2037 + $0x2c] sm:$0xf]
        %v2050 = vld [vmem:[%s2037 + $0x30] sm:$0xf]
        %v2051 = vld [vmem:[%s2037 + $0x34] sm:$0xf]
        %v2052 = vld [vmem:[%s2037 + $0x38] sm:$0xf]
        %v2053 = vld [vmem:[%s2037 + $0x3c] sm:$0xf]
        %v2054 = vld [vmem:[%s2037 + $0x40] sm:$0xf]
        %v2055 = vld [vmem:[%s2037 + $0x44] sm:$0xf]
        %v2056 = vld [vmem:[%s2037 + $0x48] sm:$0xf]
        %v2057 = vld [vmem:[%s2037 + $0x4c] sm:$0xf]
        %v2058 = vld [vmem:[%s2037 + $0x50] sm:$0xf]
        %v2059 = vld [vmem:[%s2037 + $0x54] sm:$0xf]
        %v2060 = vld [vmem:[%s2037 + $0x58] sm:$0xf]
        %v2061 = vld [vmem:[%s2037 + $0x5c] sm:$0xf]
        %v2062 = vld [vmem:[%s2037 + $0x60] sm:$0xf]
        %v2063 = vld [vmem:[%s2037 + $0x64] sm:$0xf]
        %v2064 = vld [vmem:[%s2037 + $0x68] sm:$0xf]
        %v2065 = vld [vmem:[%s2037 + $0x6c] sm:$0xf]
        %v2066 = vld [vmem:[%s2037 + $0x70] sm:$0xf]
        %v2067 = vld [vmem:[%s2037 + $0x74] sm:$0xf]
        %v2068 = vld [vmem:[%s2037 + $0x78] sm:$0xf]
        %v2069 = vld [vmem:[%s2037 + $0x7c] sm:$0xf]
        %v2102 = vunpack.c.l.b16 %v2038
        %v2103 = vunpack.c.l.b16 %v2039
        %v2104 = vunpack.c.l.b16 %v2040
        %v2105 = vunpack.c.l.b16 %v2041
        %v2106 = vunpack.c.l.b16 %v2042
        %v2107 = vunpack.c.l.b16 %v2043
        %v2108 = vunpack.c.l.b16 %v2044
        %v2109 = vunpack.c.l.b16 %v2045
        %v2110 = vunpack.c.l.b16 %v2046
        %v2111 = vunpack.c.l.b16 %v2047
        %v2112 = vunpack.c.l.b16 %v2048
        %v2113 = vunpack.c.l.b16 %v2049
        %v2114 = vunpack.c.l.b16 %v2050
        %v2115 = vunpack.c.l.b16 %v2051
        %v2116 = vunpack.c.l.b16 %v2052
        %v2117 = vunpack.c.l.b16 %v2053
        %v2118 = vunpack.c.l.b16 %v2054
        %v2119 = vunpack.c.l.b16 %v2055
        %v2120 = vunpack.c.l.b16 %v2056
        %v2121 = vunpack.c.l.b16 %v2057
        %v2122 = vunpack.c.l.b16 %v2058
        %v2123 = vunpack.c.l.b16 %v2059
        %v2124 = vunpack.c.l.b16 %v2060
        %v2125 = vunpack.c.l.b16 %v2061
        %v2126 = vunpack.c.l.b16 %v2062
        %v2127 = vunpack.c.l.b16 %v2063
        %v2128 = vunpack.c.l.b16 %v2064
        %v2129 = vunpack.c.l.b16 %v2065
        %v2130 = vunpack.c.l.b16 %v2066
        %v2131 = vunpack.c.l.b16 %v2067
        %v2132 = vunpack.c.l.b16 %v2068
        %v2133 = vunpack.c.l.b16 %v2069
        %v2134 = vpack.c.b16 %v2103, %v2102
        %v2135 = vpack.c.b16 %v2105, %v2104
        %v2136 = vpack.c.b16 %v2107, %v2106
        %v2137 = vpack.c.b16 %v2109, %v2108
        %v2138 = vpack.c.b16 %v2111, %v2110
        %v2139 = vpack.c.b16 %v2113, %v2112
        %v2140 = vpack.c.b16 %v2115, %v2114
        %v2141 = vpack.c.b16 %v2117, %v2116
        %v2142 = vpack.c.b16 %v2119, %v2118
        %v2143 = vpack.c.b16 %v2121, %v2120
        %v2144 = vpack.c.b16 %v2123, %v2122
        %v2145 = vpack.c.b16 %v2125, %v2124
        %v2146 = vpack.c.b16 %v2127, %v2126
        %v2147 = vpack.c.b16 %v2129, %v2128
        %v2148 = vpack.c.b16 %v2131, %v2130
        %v2149 = vpack.c.b16 %v2133, %v2132
        %2166 = vmatprep.subr.bf16.mxu0 0
        %2167 = vmatpush1.bf16.msra.mxu0 %v2134
        %2168 = vmatprep.subr.bf16.mxu0 0
        %2169 = vmatpush1.bf16.msra.mxu0 %v2135
        %2170 = vmatprep.subr.bf16.mxu0 0
        %2171 = vmatpush1.bf16.msra.mxu0 %v2136
        %2172 = vmatprep.subr.bf16.mxu0 0
        %2173 = vmatpush1.bf16.msra.mxu0 %v2137
        %2174 = vmatprep.subr.bf16.mxu0 0
        %2175 = vmatpush1.bf16.msra.mxu0 %v2138
        %2176 = vmatprep.subr.bf16.mxu0 0
        %2177 = vmatpush1.bf16.msra.mxu0 %v2139
        %2178 = vmatprep.subr.bf16.mxu0 0
        %2179 = vmatpush1.bf16.msra.mxu0 %v2140
        %2180 = vmatprep.subr.bf16.mxu0 0
        %2181 = vmatpush1.bf16.msra.mxu0 %v2141
        %2182 = vmatprep.subr.bf16.mxu0 0
        %2183 = vmatpush1.bf16.msra.mxu0 %v2142
        %2184 = vmatprep.subr.bf16.mxu0 0
        %2185 = vmatpush1.bf16.msra.mxu0 %v2143
        %2186 = vmatprep.subr.bf16.mxu0 0
        %2187 = vmatpush1.bf16.msra.mxu0 %v2144
        %2188 = vmatprep.subr.bf16.mxu0 0
        %2189 = vmatpush1.bf16.msra.mxu0 %v2145
        %2190 = vmatprep.subr.bf16.mxu0 0
        %2191 = vmatpush1.bf16.msra.mxu0 %v2146
        %2192 = vmatprep.subr.bf16.mxu0 0
        %2193 = vmatpush1.bf16.msra.mxu0 %v2147
        %2194 = vmatprep.subr.bf16.mxu0 0
        %2195 = vmatpush1.bf16.msra.mxu0 %v2148
        %2196 = vmatprep.subr.bf16.mxu0 0
        %2197 = vmatpush1.bf16.msra.mxu0 %v2149
        %2198 = vmatprep.mubr.bf16.mxu0 %v1868
        %2199 = vmatmul.mubr.bf16.gmra.mrb[0].mxu0 %v1867
        %v2200 = vpop.f32.mrb[0].mxu0
        %v2201 = vadd.f32 0.0, %v2200
        %v2202 = vpop.f32.mrb[0].mxu0
        %v2203 = vpop.f32.mrb[0].mxu0
        %v2204 = vpop.f32.mrb[0].mxu0
        %2205 = vdwg.mxu0
        %v2206 = vmax.f32 %v2032, %v2201
        %v2207 = vpack.c.bf16 %v2206, %v2206
        %v2208 = vld [vmem:[#allocation10] sm:$0xf]
        %v2209 = vld [vmem:[#allocation10 + $0x4] sm:$0xf]
        %v2210 = vld [vmem:[#allocation10 + $0x8] sm:$0xf]
        %v2211 = vld [vmem:[#allocation10 + $0xc] sm:$0xf]
        %v2212 = vld [vmem:[#allocation10 + $0x10] sm:$0xf]
        %v2213 = vld [vmem:[#allocation10 + $0x14] sm:$0xf]
        %v2214 = vld [vmem:[#allocation10 + $0x18] sm:$0xf]
        %v2215 = vld [vmem:[#allocation10 + $0x1c] sm:$0xf]
        %v2216 = vld [vmem:[#allocation10 + $0x20] sm:$0xf]
        %v2217 = vld [vmem:[#allocation10 + $0x24] sm:$0xf]
        %v2218 = vld [vmem:[#allocation10 + $0x28] sm:$0xf]
        %v2219 = vld [vmem:[#allocation10 + $0x2c] sm:$0xf]
        %v2220 = vld [vmem:[#allocation10 + $0x30] sm:$0xf]
        %v2221 = vld [vmem:[#allocation10 + $0x34] sm:$0xf]
        %v2222 = vld [vmem:[#allocation10 + $0x38] sm:$0xf]
        %v2223 = vld [vmem:[#allocation10 + $0x3c] sm:$0xf]
        %v2224 = vld [vmem:[#allocation10 + $0x40] sm:$0xf]
        %v2225 = vld [vmem:[#allocation10 + $0x44] sm:$0xf]
        %v2226 = vld [vmem:[#allocation10 + $0x48] sm:$0xf]
        %v2227 = vld [vmem:[#allocation10 + $0x4c] sm:$0xf]
        %v2228 = vld [vmem:[#allocation10 + $0x50] sm:$0xf]
        %v2229 = vld [vmem:[#allocation10 + $0x54] sm:$0xf]
        %v2230 = vld [vmem:[#allocation10 + $0x58] sm:$0xf]
        %v2231 = vld [vmem:[#allocation10 + $0x5c] sm:$0xf]
        %v2232 = vld [vmem:[#allocation10 + $0x60] sm:$0xf]
        %v2233 = vld [vmem:[#allocation10 + $0x64] sm:$0xf]
        %v2234 = vld [vmem:[#allocation10 + $0x68] sm:$0xf]
        %v2235 = vld [vmem:[#allocation10 + $0x6c] sm:$0xf]
        %v2236 = vld [vmem:[#allocation10 + $0x70] sm:$0xf]
        %v2237 = vld [vmem:[#allocation10 + $0x74] sm:$0xf]
        %v2238 = vld [vmem:[#allocation10 + $0x78] sm:$0xf]
        %v2239 = vld [vmem:[#allocation10 + $0x7c] sm:$0xf]
        %v2241 = vshrl.u32 %v2207, 16
        %v2260 = vunpack.c.l.b16 %v2224
        %v2261 = vunpack.c.l.b16 %v2225
        %v2262 = vunpack.c.l.b16 %v2226
        %v2263 = vunpack.c.l.b16 %v2227
        %v2264 = vunpack.c.l.b16 %v2228
        %v2265 = vunpack.c.l.b16 %v2229
        %v2266 = vunpack.c.l.b16 %v2230
        %v2267 = vunpack.c.l.b16 %v2231
        %v2268 = vunpack.c.l.b16 %v2232
        %v2269 = vunpack.c.l.b16 %v2233
        %v2270 = vunpack.c.l.b16 %v2234
        %v2271 = vunpack.c.l.b16 %v2235
        %v2272 = vunpack.c.l.b16 %v2236
        %v2273 = vunpack.c.l.b16 %v2237
        %v2274 = vunpack.c.l.b16 %v2238
        %v2275 = vunpack.c.l.b16 %v2239
        %v2276 = vpack.c.b16 %v2261, %v2260
        %v2277 = vpack.c.b16 %v2263, %v2262
        %v2278 = vpack.c.b16 %v2265, %v2264
        %v2279 = vpack.c.b16 %v2267, %v2266
        %v2280 = vpack.c.b16 %v2269, %v2268
        %v2281 = vpack.c.b16 %v2271, %v2270
        %v2282 = vpack.c.b16 %v2273, %v2272
        %v2283 = vpack.c.b16 %v2275, %v2274
        %2292 = vmatprep.subr.bf16.mxu0 0
        %2293 = vmatpush1.bf16.msra.mxu0 %v2276
        %2294 = vmatprep.subr.bf16.mxu0 0
        %2295 = vmatpush1.bf16.msra.mxu0 %v2277
        %2296 = vmatprep.subr.bf16.mxu0 0
        %2297 = vmatpush1.bf16.msra.mxu0 %v2278
        %2298 = vmatprep.subr.bf16.mxu0 0
        %2299 = vmatpush1.bf16.msra.mxu0 %v2279
        %2300 = vmatprep.subr.bf16.mxu0 0
        %2301 = vmatpush1.bf16.msra.mxu0 %v2280
        %2302 = vmatprep.subr.bf16.mxu0 0
        %2303 = vmatpush1.bf16.msra.mxu0 %v2281
        %2304 = vmatprep.subr.bf16.mxu0 0
        %2305 = vmatpush1.bf16.msra.mxu0 %v2282
        %2306 = vmatprep.subr.bf16.mxu0 0
        %2307 = vmatpush1.bf16.msra.mxu0 %v2283
        %2308 = vmatprep.subr.bf16.mxu0 0
        %2309 = vmatpush1.bf16.msra.mxu0 0
        %2310 = vmatprep.subr.bf16.mxu0 0
        %2311 = vmatpush1.bf16.msra.mxu0 0
        %2312 = vmatprep.subr.bf16.mxu0 0
        %2313 = vmatpush1.bf16.msra.mxu0 0
        %2314 = vmatprep.subr.bf16.mxu0 0
        %2315 = vmatpush1.bf16.msra.mxu0 0
        %2316 = vmatprep.subr.bf16.mxu0 0
        %2317 = vmatpush1.bf16.msra.mxu0 0
        %2318 = vmatprep.subr.bf16.mxu0 0
        %2319 = vmatpush1.bf16.msra.mxu0 0
        %2320 = vmatprep.subr.bf16.mxu0 0
        %2321 = vmatpush1.bf16.msra.mxu0 0
        %2322 = vmatprep.subr.bf16.mxu0 0
        %2323 = vmatpush1.bf16.msra.mxu0 0
        %2324 = vmatprep.mubr.bf16.mxu0 0
        %2325 = vmatmul.mubr.bf16.gmra.mrb[0].mxu0 %v2241
        %v2326 = vpop.f32.mrb[0].mxu0
        %v2327 = vadd.f32 0.0, %v2326
        %v2328 = vpop.f32.mrb[0].mxu0
        %v2329 = vpop.f32.mrb[0].mxu0
        %v2330 = vpop.f32.mrb[0].mxu0
        %2331 = vdwg.mxu0
        %v2348 = vunpack.c.l.b16 %v2208
        %v2349 = vunpack.c.l.b16 %v2209
        %v2350 = vunpack.c.l.b16 %v2210
        %v2351 = vunpack.c.l.b16 %v2211
        %v2352 = vunpack.c.l.b16 %v2212
        %v2353 = vunpack.c.l.b16 %v2213
        %v2354 = vunpack.c.l.b16 %v2214
        %v2355 = vunpack.c.l.b16 %v2215
        %v2356 = vunpack.c.l.b16 %v2216
        %v2357 = vunpack.c.l.b16 %v2217
        %v2358 = vunpack.c.l.b16 %v2218
        %v2359 = vunpack.c.l.b16 %v2219
        %v2360 = vunpack.c.l.b16 %v2220
        %v2361 = vunpack.c.l.b16 %v2221
        %v2362 = vunpack.c.l.b16 %v2222
        %v2363 = vunpack.c.l.b16 %v2223
        %v2364 = vpack.c.b16 %v2349, %v2348
        %v2365 = vpack.c.b16 %v2351, %v2350
        %v2366 = vpack.c.b16 %v2353, %v2352
        %v2367 = vpack.c.b16 %v2355, %v2354
        %v2368 = vpack.c.b16 %v2357, %v2356
        %v2369 = vpack.c.b16 %v2359, %v2358
        %v2370 = vpack.c.b16 %v2361, %v2360
        %v2371 = vpack.c.b16 %v2363, %v2362
        %2380 = vmatprep.subr.bf16.mxu0 0
        %2381 = vmatpush1.bf16.msra.mxu0 %v2364
        %2382 = vmatprep.subr.bf16.mxu0 0
        %2383 = vmatpush1.bf16.msra.mxu0 %v2365
        %2384 = vmatprep.subr.bf16.mxu0 0
        %2385 = vmatpush1.bf16.msra.mxu0 %v2366
        %2386 = vmatprep.subr.bf16.mxu0 0
        %2387 = vmatpush1.bf16.msra.mxu0 %v2367
        %2388 = vmatprep.subr.bf16.mxu0 0
        %2389 = vmatpush1.bf16.msra.mxu0 %v2368
        %2390 = vmatprep.subr.bf16.mxu0 0
        %2391 = vmatpush1.bf16.msra.mxu0 %v2369
        %2392 = vmatprep.subr.bf16.mxu0 0
        %2393 = vmatpush1.bf16.msra.mxu0 %v2370
        %2394 = vmatprep.subr.bf16.mxu0 0
        %2395 = vmatpush1.bf16.msra.mxu0 %v2371
        %2396 = vmatprep.subr.bf16.mxu0 0
        %2397 = vmatpush1.bf16.msra.mxu0 0
        %2398 = vmatprep.subr.bf16.mxu0 0
        %2399 = vmatpush1.bf16.msra.mxu0 0
        %2400 = vmatprep.subr.bf16.mxu0 0
        %2401 = vmatpush1.bf16.msra.mxu0 0
        %2402 = vmatprep.subr.bf16.mxu0 0
        %2403 = vmatpush1.bf16.msra.mxu0 0
        %2404 = vmatprep.subr.bf16.mxu0 0
        %2405 = vmatpush1.bf16.msra.mxu0 0
        %2406 = vmatprep.subr.bf16.mxu0 0
        %2407 = vmatpush1.bf16.msra.mxu0 0
        %2408 = vmatprep.subr.bf16.mxu0 0
        %2409 = vmatpush1.bf16.msra.mxu0 0
        %2410 = vmatprep.subr.bf16.mxu0 0
        %2411 = vmatpush1.bf16.msra.mxu0 0
        %2412 = vmatprep.mubr.bf16.mxu0 0
        %2413 = vmatmul.mubr.bf16.gmra.mrb[0].mxu0 %v2207
        %v2414 = vpop.f32.mrb[0].mxu0
        %v2415 = vadd.f32 %v2327, %v2414
        %v2416 = vpop.f32.mrb[0].mxu0
        %v2417 = vpop.f32.mrb[0].mxu0
        %v2418 = vpop.f32.mrb[0].mxu0
        %2419 = vdwg.mxu0
        %v2420 = vld [vmem:[#allocation10 + $0x80] sm:$0xf]
        %v2421 = vld [vmem:[#allocation10 + $0x84] sm:$0xf]
        %v2422 = vld [vmem:[#allocation10 + $0x88] sm:$0xf]
        %v2423 = vld [vmem:[#allocation10 + $0x8c] sm:$0xf]
        %v2424 = vld [vmem:[#allocation10 + $0x90] sm:$0xf]
        %v2425 = vld [vmem:[#allocation10 + $0x94] sm:$0xf]
        %v2426 = vld [vmem:[#allocation10 + $0x98] sm:$0xf]
        %v2427 = vld [vmem:[#allocation10 + $0x9c] sm:$0xf]
        %v2428 = vld [vmem:[#allocation10 + $0xa0] sm:$0xf]
        %v2429 = vld [vmem:[#allocation10 + $0xa4] sm:$0xf]
        %v2430 = vld [vmem:[#allocation10 + $0xa8] sm:$0xf]
        %v2431 = vld [vmem:[#allocation10 + $0xac] sm:$0xf]
        %v2432 = vld [vmem:[#allocation10 + $0xb0] sm:$0xf]
        %v2433 = vld [vmem:[#allocation10 + $0xb4] sm:$0xf]
        %v2434 = vld [vmem:[#allocation10 + $0xb8] sm:$0xf]
        %v2435 = vld [vmem:[#allocation10 + $0xbc] sm:$0xf]
        %v2437 = vrot.slane %v2207, 1
        %v2455 = vunpack.c.l.b16 %v2420
        %v2456 = vunpack.c.l.b16 %v2421
        %v2457 = vunpack.c.l.b16 %v2422
        %v2458 = vunpack.c.l.b16 %v2423
        %v2459 = vunpack.c.l.b16 %v2424
        %v2460 = vunpack.c.l.b16 %v2425
        %v2461 = vunpack.c.l.b16 %v2426
        %v2462 = vunpack.c.l.b16 %v2427
        %v2463 = vunpack.c.l.b16 %v2428
        %v2464 = vunpack.c.l.b16 %v2429
        %v2465 = vunpack.c.l.b16 %v2430
        %v2466 = vunpack.c.l.b16 %v2431
        %v2467 = vunpack.c.l.b16 %v2432
        %v2468 = vunpack.c.l.b16 %v2433
        %v2469 = vunpack.c.l.b16 %v2434
        %v2470 = vunpack.c.l.b16 %v2435
        %v2471 = vpack.c.b16 %v2456, %v2455
        %v2472 = vpack.c.b16 %v2458, %v2457
        %v2473 = vpack.c.b16 %v2460, %v2459
        %v2474 = vpack.c.b16 %v2462, %v2461
        %v2475 = vpack.c.b16 %v2464, %v2463
        %v2476 = vpack.c.b16 %v2466, %v2465
        %v2477 = vpack.c.b16 %v2468, %v2467
        %v2478 = vpack.c.b16 %v2470, %v2469
        %2487 = vmatprep.subr.bf16.mxu0 0
        %2488 = vmatpush1.bf16.msra.mxu0 %v2471
        %2489 = vmatprep.subr.bf16.mxu0 0
        %2490 = vmatpush1.bf16.msra.mxu0 %v2472
        %2491 = vmatprep.subr.bf16.mxu0 0
        %2492 = vmatpush1.bf16.msra.mxu0 %v2473
        %2493 = vmatprep.subr.bf16.mxu0 0
        %2494 = vmatpush1.bf16.msra.mxu0 %v2474
        %2495 = vmatprep.subr.bf16.mxu0 0
        %2496 = vmatpush1.bf16.msra.mxu0 %v2475
        %2497 = vmatprep.subr.bf16.mxu0 0
        %2498 = vmatpush1.bf16.msra.mxu0 %v2476
        %2499 = vmatprep.subr.bf16.mxu0 0
        %2500 = vmatpush1.bf16.msra.mxu0 %v2477
        %2501 = vmatprep.subr.bf16.mxu0 0
        %2502 = vmatpush1.bf16.msra.mxu0 %v2478
        %2503 = vmatprep.subr.bf16.mxu0 0
        %2504 = vmatpush1.bf16.msra.mxu0 0
        %2505 = vmatprep.subr.bf16.mxu0 0
        %2506 = vmatpush1.bf16.msra.mxu0 0
        %2507 = vmatprep.subr.bf16.mxu0 0
        %2508 = vmatpush1.bf16.msra.mxu0 0
        %2509 = vmatprep.subr.bf16.mxu0 0
        %2510 = vmatpush1.bf16.msra.mxu0 0
        %2511 = vmatprep.subr.bf16.mxu0 0
        %2512 = vmatpush1.bf16.msra.mxu0 0
        %2513 = vmatprep.subr.bf16.mxu0 0
        %2514 = vmatpush1.bf16.msra.mxu0 0
        %2515 = vmatprep.subr.bf16.mxu0 0
        %2516 = vmatpush1.bf16.msra.mxu0 0
        %2517 = vmatprep.subr.bf16.mxu0 0
        %2518 = vmatpush1.bf16.msra.mxu0 0
        %2519 = vmatprep.mubr.bf16.mxu0 0
        %2520 = vmatmul.mubr.bf16.gmra.mrb[0].mxu0 %v2437
        %v2521 = vpop.f32.mrb[0].mxu0
        %v2522 = vadd.f32 0.0, %v2521
        %v2523 = vpop.f32.mrb[0].mxu0
        %v2524 = vpop.f32.mrb[0].mxu0
        %v2525 = vpop.f32.mrb[0].mxu0
        %2526 = vdwg.mxu0
        %v2527 = vadd.f32 %v2415, %v2522
        %v2528 = vld [vmem:[#allocation10 + $0xc0] sm:$0xf]
        %v2529 = vld [vmem:[#allocation10 + $0xc4] sm:$0xf]
        %v2530 = vld [vmem:[#allocation10 + $0xc8] sm:$0xf]
        %v2531 = vld [vmem:[#allocation10 + $0xcc] sm:$0xf]
        %v2532 = vld [vmem:[#allocation10 + $0xd0] sm:$0xf]
        %v2533 = vld [vmem:[#allocation10 + $0xd4] sm:$0xf]
        %v2534 = vld [vmem:[#allocation10 + $0xd8] sm:$0xf]
        %v2535 = vld [vmem:[#allocation10 + $0xdc] sm:$0xf]
        %v2536 = vld [vmem:[#allocation10 + $0xe0] sm:$0xf]
        %v2537 = vld [vmem:[#allocation10 + $0xe4] sm:$0xf]
        %v2538 = vld [vmem:[#allocation10 + $0xe8] sm:$0xf]
        %v2539 = vld [vmem:[#allocation10 + $0xec] sm:$0xf]
        %v2540 = vld [vmem:[#allocation10 + $0xf0] sm:$0xf]
        %v2541 = vld [vmem:[#allocation10 + $0xf4] sm:$0xf]
        %v2542 = vld [vmem:[#allocation10 + $0xf8] sm:$0xf]
        %v2543 = vld [vmem:[#allocation10 + $0xfc] sm:$0xf]
        %v2544 = vrot.slane %v2241, 1
        %v2562 = vunpack.c.l.b16 %v2528
        %v2563 = vunpack.c.l.b16 %v2529
        %v2564 = vunpack.c.l.b16 %v2530
        %v2565 = vunpack.c.l.b16 %v2531
        %v2566 = vunpack.c.l.b16 %v2532
        %v2567 = vunpack.c.l.b16 %v2533
        %v2568 = vunpack.c.l.b16 %v2534
        %v2569 = vunpack.c.l.b16 %v2535
        %v2570 = vunpack.c.l.b16 %v2536
        %v2571 = vunpack.c.l.b16 %v2537
        %v2572 = vunpack.c.l.b16 %v2538
        %v2573 = vunpack.c.l.b16 %v2539
        %v2574 = vunpack.c.l.b16 %v2540
        %v2575 = vunpack.c.l.b16 %v2541
        %v2576 = vunpack.c.l.b16 %v2542
        %v2577 = vunpack.c.l.b16 %v2543
        %v2578 = vpack.c.b16 %v2563, %v2562
        %v2579 = vpack.c.b16 %v2565, %v2564
        %v2580 = vpack.c.b16 %v2567, %v2566
        %v2581 = vpack.c.b16 %v2569, %v2568
        %v2582 = vpack.c.b16 %v2571, %v2570
        %v2583 = vpack.c.b16 %v2573, %v2572
        %v2584 = vpack.c.b16 %v2575, %v2574
        %v2585 = vpack.c.b16 %v2577, %v2576
        %2594 = vmatprep.subr.bf16.mxu0 0
        %2595 = vmatpush1.bf16.msra.mxu0 %v2578
        %2596 = vmatprep.subr.bf16.mxu0 0
        %2597 = vmatpush1.bf16.msra.mxu0 %v2579
        %2598 = vmatprep.subr.bf16.mxu0 0
        %2599 = vmatpush1.bf16.msra.mxu0 %v2580
        %2600 = vmatprep.subr.bf16.mxu0 0
        %2601 = vmatpush1.bf16.msra.mxu0 %v2581
        %2602 = vmatprep.subr.bf16.mxu0 0
        %2603 = vmatpush1.bf16.msra.mxu0 %v2582
        %2604 = vmatprep.subr.bf16.mxu0 0
        %2605 = vmatpush1.bf16.msra.mxu0 %v2583
        %2606 = vmatprep.subr.bf16.mxu0 0
        %2607 = vmatpush1.bf16.msra.mxu0 %v2584
        %2608 = vmatprep.subr.bf16.mxu0 0
        %2609 = vmatpush1.bf16.msra.mxu0 %v2585
        %2610 = vmatprep.subr.bf16.mxu0 0
        %2611 = vmatpush1.bf16.msra.mxu0 0
        %2612 = vmatprep.subr.bf16.mxu0 0
        %2613 = vmatpush1.bf16.msra.mxu0 0
        %2614 = vmatprep.subr.bf16.mxu0 0
        %2615 = vmatpush1.bf16.msra.mxu0 0
        %2616 = vmatprep.subr.bf16.mxu0 0
        %2617 = vmatpush1.bf16.msra.mxu0 0
        %2618 = vmatprep.subr.bf16.mxu0 0
        %2619 = vmatpush1.bf16.msra.mxu0 0
        %2620 = vmatprep.subr.bf16.mxu0 0
        %2621 = vmatpush1.bf16.msra.mxu0 0
        %2622 = vmatprep.subr.bf16.mxu0 0
        %2623 = vmatpush1.bf16.msra.mxu0 0
        %2624 = vmatprep.subr.bf16.mxu0 0
        %2625 = vmatpush1.bf16.msra.mxu0 0
        %2626 = vmatprep.mubr.bf16.mxu0 0
        %2627 = vmatmul.mubr.bf16.gmra.mrb[0].mxu0 %v2544
        %v2628 = vpop.f32.mrb[0].mxu0
        %v2629 = vadd.f32 0.0, %v2628
        %v2630 = vpop.f32.mrb[0].mxu0
        %v2631 = vpop.f32.mrb[0].mxu0
        %v2632 = vpop.f32.mrb[0].mxu0
        %2633 = vdwg.mxu0
        %v2634 = vadd.f32 %v2527, %v2629
        %v2635 = vld [vmem:[%s10] sm:$0x1]
        %v2636 = vadd.f32 %v2634, %v2635
        %v2637 = vmax.f32 %v2636, 0.0
        %v2638 = vpack.c.bf16 %v2637, %v2637
        %v2639 = vld [vmem:[%s11] sm:$0xf]
        %v2640 = vld [vmem:[%s11 + $0x4] sm:$0xf]
        %v2641 = vld [vmem:[%s11 + $0x8] sm:$0xf]
        %v2642 = vld [vmem:[%s11 + $0xc] sm:$0xf]
        %v2643 = vld [vmem:[%s11 + $0x10] sm:$0xf]
        %v2644 = vld [vmem:[%s11 + $0x14] sm:$0xf]
        %v2645 = vld [vmem:[%s11 + $0x18] sm:$0xf]
        %v2646 = vld [vmem:[%s11 + $0x1c] sm:$0xf]
        %v2647 = vld [vmem:[%s11 + $0x20] sm:$0xf]
        %v2648 = vld [vmem:[%s11 + $0x24] sm:$0xf]
        %v2649 = vld [vmem:[%s11 + $0x28] sm:$0xf]
        %v2650 = vld [vmem:[%s11 + $0x2c] sm:$0xf]
        %v2651 = vld [vmem:[%s11 + $0x30] sm:$0xf]
        %v2652 = vld [vmem:[%s11 + $0x34] sm:$0xf]
        %v2653 = vld [vmem:[%s11 + $0x38] sm:$0xf]
        %v2654 = vld [vmem:[%s11 + $0x3c] sm:$0xf]
        %v2655 = vld [vmem:[%s12] sm:$0x1]
        %v2672 = vunpack.c.l.b16 %v2639
        %v2673 = vunpack.c.l.b16 %v2640
        %v2674 = vunpack.c.l.b16 %v2641
        %v2675 = vunpack.c.l.b16 %v2642
        %v2676 = vunpack.c.l.b16 %v2643
        %v2677 = vunpack.c.l.b16 %v2644
        %v2678 = vunpack.c.l.b16 %v2645
        %v2679 = vunpack.c.l.b16 %v2646
        %v2680 = vunpack.c.l.b16 %v2647
        %v2681 = vunpack.c.l.b16 %v2648
        %v2682 = vunpack.c.l.b16 %v2649
        %v2683 = vunpack.c.l.b16 %v2650
        %v2684 = vunpack.c.l.b16 %v2651
        %v2685 = vunpack.c.l.b16 %v2652
        %v2686 = vunpack.c.l.b16 %v2653
        %v2687 = vunpack.c.l.b16 %v2654
        %v2688 = vpack.c.b16 %v2673, %v2672
        %v2689 = vpack.c.b16 %v2675, %v2674
        %v2690 = vpack.c.b16 %v2677, %v2676
        %v2691 = vpack.c.b16 %v2679, %v2678
        %v2692 = vpack.c.b16 %v2681, %v2680
        %v2693 = vpack.c.b16 %v2683, %v2682
        %v2694 = vpack.c.b16 %v2685, %v2684
        %v2695 = vpack.c.b16 %v2687, %v2686
        %2704 = vmatprep.subr.bf16.mxu0 0
        %2705 = vmatpush1.bf16.msra.mxu0 %v2688
        %2706 = vmatprep.subr.bf16.mxu0 0
        %2707 = vmatpush1.bf16.msra.mxu0 %v2689
        %2708 = vmatprep.subr.bf16.mxu0 0
        %2709 = vmatpush1.bf16.msra.mxu0 %v2690
        %2710 = vmatprep.subr.bf16.mxu0 0
        %2711 = vmatpush1.bf16.msra.mxu0 %v2691
        %2712 = vmatprep.subr.bf16.mxu0 0
        %2713 = vmatpush1.bf16.msra.mxu0 %v2692
        %2714 = vmatprep.subr.bf16.mxu0 0
        %2715 = vmatpush1.bf16.msra.mxu0 %v2693
        %2716 = vmatprep.subr.bf16.mxu0 0
        %2717 = vmatpush1.bf16.msra.mxu0 %v2694
        %2718 = vmatprep.subr.bf16.mxu0 0
        %2719 = vmatpush1.bf16.msra.mxu0 %v2695
        %2720 = vmatprep.subr.bf16.mxu0 0
        %2721 = vmatpush1.bf16.msra.mxu0 0
        %2722 = vmatprep.subr.bf16.mxu0 0
        %2723 = vmatpush1.bf16.msra.mxu0 0
        %2724 = vmatprep.subr.bf16.mxu0 0
        %2725 = vmatpush1.bf16.msra.mxu0 0
        %2726 = vmatprep.subr.bf16.mxu0 0
        %2727 = vmatpush1.bf16.msra.mxu0 0
        %2728 = vmatprep.subr.bf16.mxu0 0
        %2729 = vmatpush1.bf16.msra.mxu0 0
        %2730 = vmatprep.subr.bf16.mxu0 0
        %2731 = vmatpush1.bf16.msra.mxu0 0
        %2732 = vmatprep.subr.bf16.mxu0 0
        %2733 = vmatpush1.bf16.msra.mxu0 0
        %2734 = vmatprep.subr.bf16.mxu0 0
        %2735 = vmatpush1.bf16.msra.mxu0 0
        %2736 = vmatprep.mubr.bf16.mxu0 0
        %2737 = vmatmul.mubr.bf16.gmra.mrb[0].mxu0 %v2638
        %v2738 = vpop.f32.mrb[0].mxu0
        %v2739 = vadd.f32 %v2655, %v2738
        %v2740 = vpop.f32.mrb[0].mxu0
        %v2741 = vpop.f32.mrb[0].mxu0
        %v2742 = vpop.f32.mrb[0].mxu0
        %2743 = vdwg.mxu0
        %2744 = vst [vmem:[%s491] sm:$0x1] %v2739
        %s2745 = sand.u32 %s316, 1
        %s2746 = scalar_lea.sflag [#allocation6], %s2745
        %s2747 = sand.u32 %s316, 1
        %s2748 = scalar_lea.vmem [#allocation12], %s2747
        // Predicated region
        $region89: #{actor_forward.1} parent=71 // pred_check
          %p2749 = pneg %p326
        $region90: #{actor_forward.1} parent=71 // pred_check_branch
          %2751 = sbr.rel (%p2749) target = $region92
        $region91: #{actor_forward.1} parent=71 // pred_region
          %s2753 = ssub.s32 16, 16
          %2754 = vsyncadd %s2746, %s2753
          %s2755 = smul.addr %s30, 16
          %s2756 = scalar_lea.hbm %s13, %s2755
          %s2758 = sshll.u32 %s2748, 4
          %s2759 = int_to_ptr.vmem [resolvable:$true] %s2758
          %2761 = dma.vmem_to_hbm [thread:$0]  %s2759, 16, %s2756, %s2746
        $region92: #{actor_forward.1} parent=71 // pred_fallthru
          _
      $region72: #{actor_forward.1} parent=5 // pred_fallthru
        _
      %p2762 = scmp.le.s32.totalorder 2, %s25
      // Predicated region
      $region93: #{actor_forward.1} parent=5 // pred_check
        %p2763 = pneg %p2762
      $region94: #{actor_forward.1} parent=5 // pred_check_branch
        %2765 = sbr.rel (%p2763) target = $region96
      $region95: #{actor_forward.1} parent=5 // pred_region
        %s2766 = ssub.s32 %s25, 2
        // Predicated region
        $region97: #{actor_forward.1} parent=95 // pred_check
          %p2767 = pneg %p332
        $region98: #{actor_forward.1} parent=95 // pred_check_branch
          %2769 = sbr.rel (%p2767) target = $region100
        $region99: #{actor_forward.1} parent=95 // pred_region
          %s2770 = sand.u32 %s317, 1
          %s2771 = scalar_lea.sflag [#allocation6], %s2770
          %s2772 = sand.u32 %s317, 1
          %s2773 = scalar_lea.vmem [#allocation12], %s2772
          %2774 = dma.done %s2771, 16
        $region100: #{actor_forward.1} parent=95 // pred_fallthru
          _
      $region96: #{actor_forward.1} parent=5 // pred_fallthru
        _
    $region6: #{actor_forward.1} parent=1 // loop_footer
      %s29 = sadd.s32 1, %s25
    $region7: #{actor_forward.1} parent=1 // loop_footer_branch
      %24 = sbr.rel target = $region3
    $region8: #{actor_forward.1} parent=1 // loop_exit
      _
    %2775 = vsyncpa [#allocation5], 1
    %s2776 = scalar_lea.sflag [#allocation5], 1
    %2777 = vsyncpa %s2776, 1
    %2778 = vsyncpa [#allocation8], 1
    %2779 = vsyncpa [#allocation11], 1
    %2780 = vsyncpa [#allocation6], 1
    %s2781 = scalar_lea.sflag [#allocation6], 1
    %2782 = vsyncpa %s2781, 1

</llo_original>
